<compile_context>
chip_gen: v6e
topology: v6e:2x2x1
jax: 0.10.0
libtpu: 0.0.40
codegen_flags: <defaults>
</compile_context>

<pallas_src>
import functools

import numpy as np

import jax
import jax.numpy as jnp
from jax.experimental import pallas as pl
from jax.experimental.pallas import tpu as pltpu


# ----------------------------------------------------------------------------------
# Fused kernel: GNN message passing -> mean pool -> Q head + RND target/predictor.
# ----------------------------------------------------------------------------------
def dgaqn_kernel(
    h_ref,      # [N, F]     node features
    a_ref,      # [N, N]     row-normalized dense adjacency
    s_ref,      # [G, N]     per-graph mean-pool scale matrix (1/|V_g| entries)
    wm_ref,     # [L, F, F]  message weights per layer
    ws_ref,     # [L, F, F]  self weights per layer
    b_ref,      # [L, 1, F]  bias per layer
    we_ref,     # [F, E]     encoder MLP weight
    be_ref,     # [1, E]     encoder MLP bias
    wq_ref,     # [E, 128]   Q head weight (zero-padded to 128 lanes; col 0 = Q)
    wt1_ref,    # [F, RH]    RND target layer 1
    bt1_ref,    # [1, RH]
    wt2_ref,    # [RH, RO]   RND target layer 2
    wp1_ref,    # [F, RH]    RND predictor layer 1
    bp1_ref,    # [1, RH]
    wp2_ref,    # [RH, RO]   RND predictor layer 2
    q_ref,      # out: [G, 128]  padded Q (column 0 is the Q value)
    nov_ref,    # out: [G, 1]    RND novelty score
    *,
    nb_layers,
    matmul_dtype,
):
    f32 = jnp.float32
    mm = matmul_dtype

    a = a_ref[...].astype(mm)
    h = h_ref[...]  # fp32 activations throughout (v5e has no bf16 VALU/EUP)

    # ---- message passing, all layers fused, h resident in VMEM/vregs --------------
    for l in range(nb_layers):
        hc = h.astype(mm)
        wm = wm_ref[l].astype(mm)
        ws = ws_ref[l].astype(mm)
        msg = jnp.dot(hc, wm, preferred_element_type=f32)              # [N, F]
        agg = jnp.dot(a, msg.astype(mm), preferred_element_type=f32)   # [N, F]
        slf = jnp.dot(hc, ws, preferred_element_type=f32)              # [N, F]
        # bias + ReLU exactly once per layer, after the fused accumulation
        h = jnp.maximum(agg + slf + b_ref[l], 0.0)

    # ---- per-graph mean pooling as a masked matmul (rides the MXU) -----------------
    pooled = jnp.dot(s_ref[...].astype(mm), h.astype(mm),
                     preferred_element_type=f32)                       # [G, F]
    pc = pooled.astype(mm)

    # ---- criterion encoder MLP -> Q (lane-padded output) ---------------------------
    e = jnp.maximum(
        jnp.dot(pc, we_ref[...].astype(mm), preferred_element_type=f32) + be_ref[...],
        0.0)
    q_ref[...] = jnp.dot(e.astype(mm), wq_ref[...].astype(mm),
                         preferred_element_type=f32)                   # [G, 128]

    # ---- RND explore critic: target / predictor MLPs on the same pooled embedding --
    ft = jnp.dot(
        jnp.maximum(
            jnp.dot(pc, wt1_ref[...].astype(mm), preferred_element_type=f32)
            + bt1_ref[...], 0.0).astype(mm),
        wt2_ref[...].astype(mm), preferred_element_type=f32)           # [G, RO]
    fp = jnp.dot(
        jnp.maximum(
            jnp.dot(pc, wp1_ref[...].astype(mm), preferred_element_type=f32)
            + bp1_ref[...], 0.0).astype(mm),
        wp2_ref[...].astype(mm), preferred_element_type=f32)           # [G, RO]

    d = ft - fp
    nov_ref[...] = jnp.sum(d * d, axis=-1, keepdims=True) * (1.0 / d.shape[-1])


# ----------------------------------------------------------------------------------
# Wrapper
# ----------------------------------------------------------------------------------
def dgaqn_forward(h0, adj, seg, wm, ws, b, we, be, wq,
                  wt1, bt1, wt2, wp1, bp1, wp2,
                  *, matmul_dtype=jnp.float32):
    """Returns (q [G], greedy_action scalar, novelty [G])."""
    N, F = h0.shape
    G = seg.shape[0]
    L = wm.shape[0]
    E = we.shape[1]
    LANE = 128

    # Zero-pad the scalar Q-head weight to 128 output lanes so the kernel's final
    # store is lane-dense (column 0 carries the real Q value).
    wq_pad = jnp.zeros((E, LANE), wq.dtype).at[:, : wq.shape[1]].set(wq)

    kernel = functools.partial(
        dgaqn_kernel, nb_layers=L, matmul_dtype=matmul_dtype)

    vmem = pl.BlockSpec(memory_space=pltpu.MemorySpace.VMEM)

    # Whole arrays are placed in VMEM once (no grid): for these graph sizes the entire
    # working set is ~1 MiB, far under the 64 MiB (v7x) / 128 MiB (v5e, v6e) VMEM.
    # For N_nodes large enough that A ([N,N]) no longer fits, the adjacency would be
    # K-tiled with a reduction grid axis + fp32 VMEM accumulator instead.
    q_pad, nov = pl.pallas_call(
        kernel,
        out_shape=(
            jax.ShapeDtypeStruct((G, LANE), jnp.float32),
            jax.ShapeDtypeStruct((G, 1), jnp.float32),
        ),
        in_specs=[vmem] * 15,
        out_specs=(vmem, vmem),
    )(h0, adj, seg, wm, ws, b, we, be, wq_pad, wt1, bt1, wt2, wp1, bp1, wp2)

    q = q_pad[:, 0]
    action = jnp.argmax(q)          # greedy action; first-max tie-break like torch.argmax
    return q, action, nov[:, 0]


# ----------------------------------------------------------------------------------
# Pure-JAX reference (fp32, highest precision)
# ----------------------------------------------------------------------------------
def reference(h0, adj, seg, wm, ws, b, we, be, wq,
              wt1, bt1, wt2, wp1, bp1, wp2):
    hi = jax.lax.Precision.HIGHEST
    h = h0
    for l in range(wm.shape[0]):
        msg = jnp.dot(h, wm[l], precision=hi)
        h = jax.nn.relu(jnp.dot(adj, msg, precision=hi)
                        + jnp.dot(h, ws[l], precision=hi) + b[l])
    pooled = jnp.dot(seg, h, precision=hi)
    e = jax.nn.relu(jnp.dot(pooled, we, precision=hi) + be)
    q = jnp.dot(e, wq, precision=hi)[:, 0]
    ft = jnp.dot(jax.nn.relu(jnp.dot(pooled, wt1, precision=hi) + bt1), wt2, precision=hi)
    fp = jnp.dot(jax.nn.relu(jnp.dot(pooled, wp1, precision=hi) + bp1), wp2, precision=hi)
    nov = jnp.mean((ft - fp) ** 2, axis=-1)
    return q, jnp.argmax(q), nov


# ----------------------------------------------------------------------------------
# Demo
# ----------------------------------------------------------------------------------
if __name__ == "__main__":
    key = jax.random.PRNGKey(0)

    # Small shapes consistent with the module: 8 candidate graphs, 8 nodes each,
    # 128-dim (lane-dense) features/hidden, 3 GNN layers.
    N, F, G, L = 64, 128, 8, 3
    E, RH, RO = 128, 128, 128

    ks = jax.random.split(key, 16)
    h0 = jax.random.normal(ks[0], (N, F), jnp.float32)

    # Block-diagonal (within-graph) random symmetric adjacency, row-normalized
    # (mean aggregation); self connections handled by W_self.
    nodes_per_graph = N // G
    batch_idx = jnp.repeat(jnp.arange(G), nodes_per_graph)                 # [N]
    same_graph = batch_idx[:, None] == batch_idx[None, :]
    rand = jax.random.uniform(ks[1], (N, N))
    rand = jnp.maximum(rand, rand.T)
    adj = ((rand > 0.5) & same_graph & (~jnp.eye(N, dtype=bool))).astype(jnp.float32)
    deg = jnp.maximum(adj.sum(axis=1, keepdims=True), 1.0)
    adj = adj / deg

    # Per-graph mean-pool scale matrix: S[g, n] = 1/|V_g| if node n belongs to graph g.
    # Divides by each graph's true node count (not the padded total).
    seg = (batch_idx[None, :] == jnp.arange(G)[:, None]).astype(jnp.float32)
    seg = seg / jnp.maximum(seg.sum(axis=1, keepdims=True), 1.0)

    def w(k, shape, fan_in):
        return jax.random.normal(k, shape, jnp.float32) / jnp.sqrt(float(fan_in))

    wm = w(ks[2], (L, F, F), F)
    ws_ = w(ks[3], (L, F, F), F)
    b = 0.1 * jax.random.normal(ks[4], (L, 1, F), jnp.float32)
    we = w(ks[5], (F, E), F)
    be = 0.1 * jax.random.normal(ks[6], (1, E), jnp.float32)
    wq = w(ks[7], (E, 1), E)
    wt1 = w(ks[8], (F, RH), F)
    bt1 = 0.1 * jax.random.normal(ks[9], (1, RH), jnp.float32)
    wt2 = w(ks[10], (RH, RO), RH)
    wp1 = w(ks[11], (F, RH), F)
    bp1 = 0.1 * jax.random.normal(ks[12], (1, RH), jnp.float32)
    wp2 = w(ks[13], (RH, RO), RH)

    args = (h0, adj, seg, wm, ws_, b, we, be, wq, wt1, bt1, wt2, wp1, bp1, wp2)

    # Reference (fp32, highest precision)
    q_ref, action_ref, nov_ref = jax.block_until_ready(reference(*args))

    # fp32 matmul operands (v5e-friendly path) — checked against the reference.
    q, action, nov = jax.block_until_ready(
        dgaqn_forward(*args, matmul_dtype=jnp.float32))
    np.testing.assert_allclose(np.asarray(q), np.asarray(q_ref), rtol=5e-2, atol=1e-2)
    np.testing.assert_allclose(np.asarray(nov), np.asarray(nov_ref), rtol=5e-2, atol=1e-2)
    assert int(action) == int(action_ref)

    # bf16 matmul operands + fp32 accumulation (v6e / v7x MXU path) — loose check.
    q16, action16, nov16 = jax.block_until_ready(
        dgaqn_forward(*args, matmul_dtype=jnp.bfloat16))
    np.testing.assert_allclose(np.asarray(q16), np.asarray(q_ref), rtol=2e-1, atol=5e-2)
    np.testing.assert_allclose(np.asarray(nov16), np.asarray(nov_ref), rtol=2e-1, atol=5e-2)

    print("KERNEL_OK")
</pallas_src>

<mosaic_0001>
module attributes {stable_mosaic.version = 11 : i64} {
  func.func @dgaqn_kernel(%arg0: memref<64x128xf32, #tpu.memory_space<vmem>>, %arg1: memref<64x64xf32, #tpu.memory_space<vmem>>, %arg2: memref<8x64xf32, #tpu.memory_space<vmem>>, %arg3: memref<3x128x128xf32, #tpu.memory_space<vmem>>, %arg4: memref<3x128x128xf32, #tpu.memory_space<vmem>>, %arg5: memref<3x1x128xf32, #tpu.memory_space<vmem>>, %arg6: memref<128x128xf32, #tpu.memory_space<vmem>>, %arg7: memref<1x128xf32, #tpu.memory_space<vmem>>, %arg8: memref<128x128xf32, #tpu.memory_space<vmem>>, %arg9: memref<128x128xf32, #tpu.memory_space<vmem>>, %arg10: memref<1x128xf32, #tpu.memory_space<vmem>>, %arg11: memref<128x128xf32, #tpu.memory_space<vmem>>, %arg12: memref<128x128xf32, #tpu.memory_space<vmem>>, %arg13: memref<1x128xf32, #tpu.memory_space<vmem>>, %arg14: memref<128x128xf32, #tpu.memory_space<vmem>>, %arg15: memref<8x128xf32, #tpu.memory_space<vmem>>, %arg16: memref<8x1xf32, #tpu.memory_space<vmem>>) attributes {dimension_semantics = [], scalar_prefetch = 0 : i64, scratch_operands = 0 : i64, tpu.core_type = #tpu.core_type<tc>} {
    %c0 = arith.constant 0 : index
    %c0_0 = arith.constant 0 : index
    %0 = vector.load %arg1[%c0, %c0_0] : memref<64x64xf32, #tpu.memory_space<vmem>>, vector<64x64xf32>
    %c0_1 = arith.constant 0 : index
    %c0_2 = arith.constant 0 : index
    %1 = vector.load %arg0[%c0_1, %c0_2] : memref<64x128xf32, #tpu.memory_space<vmem>>, vector<64x128xf32>
    %c0_3 = arith.constant 0 : index
    %c0_4 = arith.constant 0 : index
    %c0_5 = arith.constant 0 : index
    %2 = vector.load %arg3[%c0_3, %c0_4, %c0_5] : memref<3x128x128xf32, #tpu.memory_space<vmem>>, vector<1x128x128xf32>
    %3 = vector.shape_cast %2 : vector<1x128x128xf32> to vector<128x128xf32>
    %c0_6 = arith.constant 0 : index
    %c0_7 = arith.constant 0 : index
    %c0_8 = arith.constant 0 : index
    %4 = vector.load %arg4[%c0_6, %c0_7, %c0_8] : memref<3x128x128xf32, #tpu.memory_space<vmem>>, vector<1x128x128xf32>
    %5 = vector.shape_cast %4 : vector<1x128x128xf32> to vector<128x128xf32>
    %cst = arith.constant dense<0.000000e+00> : vector<64x128xf32>
    %6 = tpu.matmul %1, %3, %cst {dimension_numbers = #tpu.dot_dimension_numbers<[1], [0], [0], [1], [0, 0, 1, 1], [], []>} : vector<64x128xf32>, vector<128x128xf32>, vector<64x128xf32> -> vector<64x128xf32>
    %cst_9 = arith.constant dense<0.000000e+00> : vector<64x128xf32>
    %7 = tpu.matmul %0, %6, %cst_9 {dimension_numbers = #tpu.dot_dimension_numbers<[1], [0], [0], [1], [0, 0, 1, 1], [], []>} : vector<64x64xf32>, vector<64x128xf32>, vector<64x128xf32> -> vector<64x128xf32>
    %cst_10 = arith.constant dense<0.000000e+00> : vector<64x128xf32>
    %8 = tpu.matmul %1, %5, %cst_10 {dimension_numbers = #tpu.dot_dimension_numbers<[1], [0], [0], [1], [0, 0, 1, 1], [], []>} : vector<64x128xf32>, vector<128x128xf32>, vector<64x128xf32> -> vector<64x128xf32>
    %9 = arith.addf %7, %8 : vector<64x128xf32>
    %c0_11 = arith.constant 0 : index
    %c0_12 = arith.constant 0 : index
    %c0_13 = arith.constant 0 : index
    %10 = vector.load %arg5[%c0_11, %c0_12, %c0_13] : memref<3x1x128xf32, #tpu.memory_space<vmem>>, vector<1x1x128xf32>
    %11 = vector.shape_cast %10 : vector<1x1x128xf32> to vector<1x128xf32>
    %12 = vector.broadcast %11 : vector<1x128xf32> to vector<64x128xf32>
    %13 = arith.addf %9, %12 : vector<64x128xf32>
    %cst_14 = arith.constant 0.000000e+00 : f32
    %14 = vector.broadcast %cst_14 : f32 to vector<64x128xf32>
    %15 = arith.maximumf %13, %14 : vector<64x128xf32>
    %c1 = arith.constant 1 : index
    %c0_15 = arith.constant 0 : index
    %c0_16 = arith.constant 0 : index
    %16 = vector.load %arg3[%c1, %c0_15, %c0_16] : memref<3x128x128xf32, #tpu.memory_space<vmem>>, vector<1x128x128xf32>
    %17 = vector.shape_cast %16 : vector<1x128x128xf32> to vector<128x128xf32>
    %c1_17 = arith.constant 1 : index
    %c0_18 = arith.constant 0 : index
    %c0_19 = arith.constant 0 : index
    %18 = vector.load %arg4[%c1_17, %c0_18, %c0_19] : memref<3x128x128xf32, #tpu.memory_space<vmem>>, vector<1x128x128xf32>
    %19 = vector.shape_cast %18 : vector<1x128x128xf32> to vector<128x128xf32>
    %cst_20 = arith.constant dense<0.000000e+00> : vector<64x128xf32>
    %20 = tpu.matmul %15, %17, %cst_20 {dimension_numbers = #tpu.dot_dimension_numbers<[1], [0], [0], [1], [0, 0, 1, 1], [], []>} : vector<64x128xf32>, vector<128x128xf32>, vector<64x128xf32> -> vector<64x128xf32>
    %cst_21 = arith.constant dense<0.000000e+00> : vector<64x128xf32>
    %21 = tpu.matmul %0, %20, %cst_21 {dimension_numbers = #tpu.dot_dimension_numbers<[1], [0], [0], [1], [0, 0, 1, 1], [], []>} : vector<64x64xf32>, vector<64x128xf32>, vector<64x128xf32> -> vector<64x128xf32>
    %cst_22 = arith.constant dense<0.000000e+00> : vector<64x128xf32>
    %22 = tpu.matmul %15, %19, %cst_22 {dimension_numbers = #tpu.dot_dimension_numbers<[1], [0], [0], [1], [0, 0, 1, 1], [], []>} : vector<64x128xf32>, vector<128x128xf32>, vector<64x128xf32> -> vector<64x128xf32>
    %23 = arith.addf %21, %22 : vector<64x128xf32>
    %c1_23 = arith.constant 1 : index
    %c0_24 = arith.constant 0 : index
    %c0_25 = arith.constant 0 : index
    %24 = vector.load %arg5[%c1_23, %c0_24, %c0_25] : memref<3x1x128xf32, #tpu.memory_space<vmem>>, vector<1x1x128xf32>
    %25 = vector.shape_cast %24 : vector<1x1x128xf32> to vector<1x128xf32>
    %26 = vector.broadcast %25 : vector<1x128xf32> to vector<64x128xf32>
    %27 = arith.addf %23, %26 : vector<64x128xf32>
    %cst_26 = arith.constant 0.000000e+00 : f32
    %28 = vector.broadcast %cst_26 : f32 to vector<64x128xf32>
    %29 = arith.maximumf %27, %28 : vector<64x128xf32>
    %c2 = arith.constant 2 : index
    %c0_27 = arith.constant 0 : index
    %c0_28 = arith.constant 0 : index
    %30 = vector.load %arg3[%c2, %c0_27, %c0_28] : memref<3x128x128xf32, #tpu.memory_space<vmem>>, vector<1x128x128xf32>
    %31 = vector.shape_cast %30 : vector<1x128x128xf32> to vector<128x128xf32>
    %c2_29 = arith.constant 2 : index
    %c0_30 = arith.constant 0 : index
    %c0_31 = arith.constant 0 : index
    %32 = vector.load %arg4[%c2_29, %c0_30, %c0_31] : memref<3x128x128xf32, #tpu.memory_space<vmem>>, vector<1x128x128xf32>
    %33 = vector.shape_cast %32 : vector<1x128x128xf32> to vector<128x128xf32>
    %cst_32 = arith.constant dense<0.000000e+00> : vector<64x128xf32>
    %34 = tpu.matmul %29, %31, %cst_32 {dimension_numbers = #tpu.dot_dimension_numbers<[1], [0], [0], [1], [0, 0, 1, 1], [], []>} : vector<64x128xf32>, vector<128x128xf32>, vector<64x128xf32> -> vector<64x128xf32>
    %cst_33 = arith.constant dense<0.000000e+00> : vector<64x128xf32>
    %35 = tpu.matmul %0, %34, %cst_33 {dimension_numbers = #tpu.dot_dimension_numbers<[1], [0], [0], [1], [0, 0, 1, 1], [], []>} : vector<64x64xf32>, vector<64x128xf32>, vector<64x128xf32> -> vector<64x128xf32>
    %cst_34 = arith.constant dense<0.000000e+00> : vector<64x128xf32>
    %36 = tpu.matmul %29, %33, %cst_34 {dimension_numbers = #tpu.dot_dimension_numbers<[1], [0], [0], [1], [0, 0, 1, 1], [], []>} : vector<64x128xf32>, vector<128x128xf32>, vector<64x128xf32> -> vector<64x128xf32>
    %37 = arith.addf %35, %36 : vector<64x128xf32>
    %c2_35 = arith.constant 2 : index
    %c0_36 = arith.constant 0 : index
    %c0_37 = arith.constant 0 : index
    %38 = vector.load %arg5[%c2_35, %c0_36, %c0_37] : memref<3x1x128xf32, #tpu.memory_space<vmem>>, vector<1x1x128xf32>
    %39 = vector.shape_cast %38 : vector<1x1x128xf32> to vector<1x128xf32>
    %40 = vector.broadcast %39 : vector<1x128xf32> to vector<64x128xf32>
    %41 = arith.addf %37, %40 : vector<64x128xf32>
    %cst_38 = arith.constant 0.000000e+00 : f32
    %42 = vector.broadcast %cst_38 : f32 to vector<64x128xf32>
    %43 = arith.maximumf %41, %42 : vector<64x128xf32>
    %c0_39 = arith.constant 0 : index
    %c0_40 = arith.constant 0 : index
    %44 = vector.load %arg2[%c0_39, %c0_40] : memref<8x64xf32, #tpu.memory_space<vmem>>, vector<8x64xf32>
    %cst_41 = arith.constant dense<0.000000e+00> : vector<8x128xf32>
    %45 = tpu.matmul %44, %43, %cst_41 {dimension_numbers = #tpu.dot_dimension_numbers<[1], [0], [0], [1], [0, 0, 1, 1], [], []>} : vector<8x64xf32>, vector<64x128xf32>, vector<8x128xf32> -> vector<8x128xf32>
    %c0_42 = arith.constant 0 : index
    %c0_43 = arith.constant 0 : index
    %46 = vector.load %arg6[%c0_42, %c0_43] : memref<128x128xf32, #tpu.memory_space<vmem>>, vector<128x128xf32>
    %cst_44 = arith.constant dense<0.000000e+00> : vector<8x128xf32>
    %47 = tpu.matmul %45, %46, %cst_44 {dimension_numbers = #tpu.dot_dimension_numbers<[1], [0], [0], [1], [0, 0, 1, 1], [], []>} : vector<8x128xf32>, vector<128x128xf32>, vector<8x128xf32> -> vector<8x128xf32>
    %c0_45 = arith.constant 0 : index
    %c0_46 = arith.constant 0 : index
    %48 = vector.load %arg7[%c0_45, %c0_46] : memref<1x128xf32, #tpu.memory_space<vmem>>, vector<1x128xf32>
    %49 = vector.broadcast %48 : vector<1x128xf32> to vector<8x128xf32>
    %50 = arith.addf %47, %49 : vector<8x128xf32>
    %cst_47 = arith.constant 0.000000e+00 : f32
    %51 = vector.broadcast %cst_47 : f32 to vector<8x128xf32>
    %52 = arith.maximumf %50, %51 : vector<8x128xf32>
    %c0_48 = arith.constant 0 : index
    %c0_49 = arith.constant 0 : index
    %53 = vector.load %arg8[%c0_48, %c0_49] : memref<128x128xf32, #tpu.memory_space<vmem>>, vector<128x128xf32>
    %cst_50 = arith.constant dense<0.000000e+00> : vector<8x128xf32>
    %54 = tpu.matmul %52, %53, %cst_50 {dimension_numbers = #tpu.dot_dimension_numbers<[1], [0], [0], [1], [0, 0, 1, 1], [], []>} : vector<8x128xf32>, vector<128x128xf32>, vector<8x128xf32> -> vector<8x128xf32>
    %c0_51 = arith.constant 0 : index
    %c0_52 = arith.constant 0 : index
    %55 = vector.load %arg15[%c0_51, %c0_52] : memref<8x128xf32, #tpu.memory_space<vmem>>, vector<8x128xf32>
    tpu.vector_store %arg15[%c0_51, %c0_52], %54 {strides = array<i32>} : memref<8x128xf32, #tpu.memory_space<vmem>>, vector<8x128xf32>,
    %c0_53 = arith.constant 0 : index
    %c0_54 = arith.constant 0 : index
    %56 = vector.load %arg9[%c0_53, %c0_54] : memref<128x128xf32, #tpu.memory_space<vmem>>, vector<128x128xf32>
    %cst_55 = arith.constant dense<0.000000e+00> : vector<8x128xf32>
    %57 = tpu.matmul %45, %56, %cst_55 {dimension_numbers = #tpu.dot_dimension_numbers<[1], [0], [0], [1], [0, 0, 1, 1], [], []>} : vector<8x128xf32>, vector<128x128xf32>, vector<8x128xf32> -> vector<8x128xf32>
    %c0_56 = arith.constant 0 : index
    %c0_57 = arith.constant 0 : index
    %58 = vector.load %arg10[%c0_56, %c0_57] : memref<1x128xf32, #tpu.memory_space<vmem>>, vector<1x128xf32>
    %59 = vector.broadcast %58 : vector<1x128xf32> to vector<8x128xf32>
    %60 = arith.addf %57, %59 : vector<8x128xf32>
    %cst_58 = arith.constant 0.000000e+00 : f32
    %61 = vector.broadcast %cst_58 : f32 to vector<8x128xf32>
    %62 = arith.maximumf %60, %61 : vector<8x128xf32>
    %c0_59 = arith.constant 0 : index
    %c0_60 = arith.constant 0 : index
    %63 = vector.load %arg11[%c0_59, %c0_60] : memref<128x128xf32, #tpu.memory_space<vmem>>, vector<128x128xf32>
    %cst_61 = arith.constant dense<0.000000e+00> : vector<8x128xf32>
    %64 = tpu.matmul %62, %63, %cst_61 {dimension_numbers = #tpu.dot_dimension_numbers<[1], [0], [0], [1], [0, 0, 1, 1], [], []>} : vector<8x128xf32>, vector<128x128xf32>, vector<8x128xf32> -> vector<8x128xf32>
    %c0_62 = arith.constant 0 : index
    %c0_63 = arith.constant 0 : index
    %65 = vector.load %arg12[%c0_62, %c0_63] : memref<128x128xf32, #tpu.memory_space<vmem>>, vector<128x128xf32>
    %cst_64 = arith.constant dense<0.000000e+00> : vector<8x128xf32>
    %66 = tpu.matmul %45, %65, %cst_64 {dimension_numbers = #tpu.dot_dimension_numbers<[1], [0], [0], [1], [0, 0, 1, 1], [], []>} : vector<8x128xf32>, vector<128x128xf32>, vector<8x128xf32> -> vector<8x128xf32>
    %c0_65 = arith.constant 0 : index
    %c0_66 = arith.constant 0 : index
    %67 = vector.load %arg13[%c0_65, %c0_66] : memref<1x128xf32, #tpu.memory_space<vmem>>, vector<1x128xf32>
    %68 = vector.broadcast %67 : vector<1x128xf32> to vector<8x128xf32>
    %69 = arith.addf %66, %68 : vector<8x128xf32>
    %cst_67 = arith.constant 0.000000e+00 : f32
    %70 = vector.broadcast %cst_67 : f32 to vector<8x128xf32>
    %71 = arith.maximumf %69, %70 : vector<8x128xf32>
    %c0_68 = arith.constant 0 : index
    %c0_69 = arith.constant 0 : index
    %72 = vector.load %arg14[%c0_68, %c0_69] : memref<128x128xf32, #tpu.memory_space<vmem>>, vector<128x128xf32>
    %cst_70 = arith.constant dense<0.000000e+00> : vector<8x128xf32>
    %73 = tpu.matmul %71, %72, %cst_70 {dimension_numbers = #tpu.dot_dimension_numbers<[1], [0], [0], [1], [0, 0, 1, 1], [], []>} : vector<8x128xf32>, vector<128x128xf32>, vector<8x128xf32> -> vector<8x128xf32>
    %74 = arith.subf %64, %73 : vector<8x128xf32>
    %75 = arith.mulf %74, %74 : vector<8x128xf32>
    %cst_71 = arith.constant dense<0.000000e+00> : vector<8xf32>
    %76 = vector.multi_reduction <add>, %75, %cst_71 [1] : vector<8x128xf32> to vector<8xf32>
    %77 = vector.shape_cast %76 : vector<8xf32> to vector<8x1xf32>
    %cst_72 = arith.constant 7.812500e-03 : f32
    %78 = vector.broadcast %cst_72 : f32 to vector<8x1xf32>
    %79 = arith.mulf %77, %78 : vector<8x1xf32>
    %c0_73 = arith.constant 0 : index
    %c0_74 = arith.constant 0 : index
    %80 = vector.load %arg16[%c0_73, %c0_74] : memref<8x1xf32, #tpu.memory_space<vmem>>, vector<8x1xf32>
    tpu.vector_store %arg16[%c0_73, %c0_74], %79 {strides = array<i32>} : memref<8x1xf32, #tpu.memory_space<vmem>>, vector<8x1xf32>,
    return
  }
}

</mosaic_0001>

<llo_original>
// kernel: tpu_custom_call.1
$region0: #{tpu_custom_call.1}
  #allocation0 [shape = 'u32[]', space=smem, size = 0x4, offset = 0x4, fixed_abs, tag = 'smem constant byte address 0x4 - core index']
  #allocation1 [shape = 'u32[144,128]{1,0:T(1,128)}', space=vmem, size = 0x12000, scoped, tag = 'internal scratch']
  %s0 = inlined_call_operand.hbm [shape: f32[64,128], index: 0, kind: input, shape index: {}]
  %s1 = inlined_call_operand.hbm [shape: f32[64,64], index: 1, kind: input, shape index: {}]
  %s2 = inlined_call_operand.hbm [shape: f32[8,64], index: 2, kind: input, shape index: {}]
  %s3 = inlined_call_operand.hbm [shape: f32[3,128,128], index: 3, kind: input, shape index: {}]
  %s4 = inlined_call_operand.hbm [shape: f32[3,128,128], index: 4, kind: input, shape index: {}]
  %s5 = inlined_call_operand.vmem [shape: f32[3,1,128], index: 5, kind: input, shape index: {}]
  %s6 = inlined_call_operand.hbm [shape: f32[128,128], index: 6, kind: input, shape index: {}]
  %s7 = inlined_call_operand.vmem [shape: f32[1,128], index: 7, kind: input, shape index: {}]
  %s8 = inlined_call_operand.hbm [shape: f32[128,128], index: 8, kind: input, shape index: {}]
  %s9 = inlined_call_operand.hbm [shape: f32[128,128], index: 9, kind: input, shape index: {}]
  %s10 = inlined_call_operand.vmem [shape: f32[1,128], index: 10, kind: input, shape index: {}]
  %s11 = inlined_call_operand.hbm [shape: f32[128,128], index: 11, kind: input, shape index: {}]
  %s12 = inlined_call_operand.hbm [shape: f32[128,128], index: 12, kind: input, shape index: {}]
  %s13 = inlined_call_operand.vmem [shape: f32[1,128], index: 13, kind: input, shape index: {}]
  %s14 = inlined_call_operand.hbm [shape: f32[128,128], index: 14, kind: input, shape index: {}]
  %s15 = inlined_call_operand.hbm [shape: f32[8,128], index: 15, kind: output, shape index: {0}]
  %s16 = inlined_call_operand.vmem [shape: f32[8,1], index: 16, kind: output, shape index: {1}]
  %17 = xla_tuple %s15, %s16
  %s18 = sld [smem:[#allocation0]]
  $region122: #{tpu_custom_call.1} parent=0
    _
  %s20 = ssub.s32 1, %s18
  %s21 = scalar_select 0, %s20, %s18
  $region1: #{tpu_custom_call.1} parent=0
    #allocation2 [shape = 'u8[32768]{0}', space=vmem, size = 0x8000, scoped, tag = 'input window, operand 0, single buffered']
    #allocation3 [shape = 's32[1]{0}', space=sflag, size = 0x4, scoped, tag = 'scoped memory for tpu_custom_call.1']
    #allocation4 [shape = 's32[1]{0}', space=sflag, size = 0x4, scoped, tag = 'scoped memory for tpu_custom_call.1']
    #allocation5 [shape = 'u8[32768]{0}', space=vmem, size = 0x8000, scoped, tag = 'input window, operand 1, single buffered']
    #allocation6 [shape = 's32[1]{0}', space=sflag, size = 0x4, scoped, tag = 'scoped memory for tpu_custom_call.1']
    #allocation7 [shape = 'u8[4096]{0}', space=vmem, size = 0x1000, scoped, tag = 'input window, operand 2, single buffered']
    #allocation8 [shape = 'u8[196608]{0}', space=vmem, size = 0x30000, scoped, tag = 'input window, operand 3, single buffered']
    #allocation9 [shape = 's32[1]{0}', space=sflag, size = 0x4, scoped, tag = 'scoped memory for tpu_custom_call.1']
    #allocation10 [shape = 'u8[196608]{0}', space=vmem, size = 0x30000, scoped, tag = 'input window, operand 4, single buffered']
    #allocation11 [shape = 'u8[65536]{0}', space=vmem, size = 0x10000, scoped, tag = 'input window, operand 6, single buffered']
    #allocation12 [shape = 's32[1]{0}', space=sflag, size = 0x4, scoped, tag = 'scoped memory for tpu_custom_call.1']
    #allocation13 [shape = 'u8[65536]{0}', space=vmem, size = 0x10000, scoped, tag = 'input window, operand 8, single buffered']
    #allocation14 [shape = 'u8[65536]{0}', space=vmem, size = 0x10000, scoped, tag = 'input window, operand 9, single buffered']
    #allocation15 [shape = 's32[1]{0}', space=sflag, size = 0x4, scoped, tag = 'scoped memory for tpu_custom_call.1']
    #allocation16 [shape = 'u8[65536]{0}', space=vmem, size = 0x10000, scoped, tag = 'input window, operand 11, single buffered']
    #allocation17 [shape = 'u8[65536]{0}', space=vmem, size = 0x10000, scoped, tag = 'input window, operand 12, single buffered']
    #allocation18 [shape = 's32[1]{0}', space=sflag, size = 0x4, scoped, tag = 'scoped memory for tpu_custom_call.1']
    #allocation19 [shape = 'u8[65536]{0}', space=vmem, size = 0x10000, scoped, tag = 'input window, operand 14, single buffered']
    #allocation20 [shape = 'u8[4096]{0}', space=vmem, size = 0x1000, scoped, tag = 'output window, operand 0, single buffered']
    %22 = vsyncpa [#allocation3], 0
    %23 = vsyncpa [#allocation6], 0
    %24 = vsyncpa [#allocation9], 0
    %25 = vsyncpa [#allocation12], 0
    %26 = vsyncpa [#allocation15], 0
    %27 = vsyncpa [#allocation18], 0
    %28 = vsyncpa [#allocation4], 0
    // Predicated region
    $region2: #{tpu_custom_call.1} parent=1 // pred_check
      _
    $region3: #{tpu_custom_call.1} parent=1 // pred_check_branch
      %30 = sbr.rel (0) target = $region5
    $region4: #{tpu_custom_call.1} parent=1 // pred_region
      %s32 = ssub.s32 1024, 1024
      %33 = vsyncadd [#allocation3], %s32
      %s34 = sshll.u32 [#allocation2], 4
      %s35 = int_to_ptr.vmem [resolvable:$true] %s34
      %40 = dma.hbm_to_vmem [thread:$0]  %s0, 1024, %s35, [#allocation3], 128, 128, 8
    $region5: #{tpu_custom_call.1} parent=1 // pred_fallthru
      _
    // Predicated region
    $region6: #{tpu_custom_call.1} parent=1 // pred_check
      _
    $region7: #{tpu_custom_call.1} parent=1 // pred_check_branch
      %42 = sbr.rel (0) target = $region9
    $region8: #{tpu_custom_call.1} parent=1 // pred_region
      %s44 = ssub.s32 1024, 1024
      %45 = vsyncadd [#allocation6], %s44
      %s46 = sshll.u32 [#allocation5], 4
      %s47 = int_to_ptr.vmem [resolvable:$true] %s46
      %52 = dma.hbm_to_vmem [thread:$0]  %s1, 1024, %s47, [#allocation6], 128, 128, 8
    $region9: #{tpu_custom_call.1} parent=1 // pred_fallthru
      _
    // Predicated region
    $region10: #{tpu_custom_call.1} parent=1 // pred_check
      _
    $region11: #{tpu_custom_call.1} parent=1 // pred_check_branch
      %54 = sbr.rel (0) target = $region13
    $region12: #{tpu_custom_call.1} parent=1 // pred_region
      %s56 = ssub.s32 128, 128
      %57 = vsyncadd [#allocation6], %s56
      %s59 = sshll.u32 [#allocation7], 4
      %s60 = int_to_ptr.vmem [resolvable:$true] %s59
      %62 = dma.hbm_to_vmem [thread:$0]  %s2, 128, %s60, [#allocation6]
    $region13: #{tpu_custom_call.1} parent=1 // pred_fallthru
      _
    // Predicated region
    $region14: #{tpu_custom_call.1} parent=1 // pred_check
      _
    $region15: #{tpu_custom_call.1} parent=1 // pred_check_branch
      %64 = sbr.rel (0) target = $region17
    $region16: #{tpu_custom_call.1} parent=1 // pred_region
      %s66 = ssub.s32 6144, 6144
      %67 = vsyncadd [#allocation9], %s66
      %s68 = sshll.u32 [#allocation8], 4
      %s69 = int_to_ptr.vmem [resolvable:$true] %s68
      %74 = dma.hbm_to_vmem [thread:$0]  %s3, 6144, %s69, [#allocation9], 128, 128, 8
    $region17: #{tpu_custom_call.1} parent=1 // pred_fallthru
      _
    // Predicated region
    $region18: #{tpu_custom_call.1} parent=1 // pred_check
      _
    $region19: #{tpu_custom_call.1} parent=1 // pred_check_branch
      %76 = sbr.rel (0) target = $region21
    $region20: #{tpu_custom_call.1} parent=1 // pred_region
      %s78 = ssub.s32 6144, 6144
      %79 = vsyncadd [#allocation9], %s78
      %s80 = sshll.u32 [#allocation10], 4
      %s81 = int_to_ptr.vmem [resolvable:$true] %s80
      %86 = dma.hbm_to_vmem [thread:$0]  %s4, 6144, %s81, [#allocation9], 128, 128, 8
    $region21: #{tpu_custom_call.1} parent=1 // pred_fallthru
      _
    // Predicated region
    $region22: #{tpu_custom_call.1} parent=1 // pred_check
      _
    $region23: #{tpu_custom_call.1} parent=1 // pred_check_branch
      %88 = sbr.rel (0) target = $region25
    $region24: #{tpu_custom_call.1} parent=1 // pred_region
      _
    $region25: #{tpu_custom_call.1} parent=1 // pred_fallthru
      _
    // Predicated region
    $region26: #{tpu_custom_call.1} parent=1 // pred_check
      _
    $region27: #{tpu_custom_call.1} parent=1 // pred_check_branch
      %90 = sbr.rel (0) target = $region29
    $region28: #{tpu_custom_call.1} parent=1 // pred_region
      %s92 = ssub.s32 2048, 2048
      %93 = vsyncadd [#allocation12], %s92
      %s94 = sshll.u32 [#allocation11], 4
      %s95 = int_to_ptr.vmem [resolvable:$true] %s94
      %100 = dma.hbm_to_vmem [thread:$0]  %s6, 2048, %s95, [#allocation12], 128, 128, 8
    $region29: #{tpu_custom_call.1} parent=1 // pred_fallthru
      _
    // Predicated region
    $region30: #{tpu_custom_call.1} parent=1 // pred_check
      _
    $region31: #{tpu_custom_call.1} parent=1 // pred_check_branch
      %102 = sbr.rel (0) target = $region33
    $region32: #{tpu_custom_call.1} parent=1 // pred_region
      _
    $region33: #{tpu_custom_call.1} parent=1 // pred_fallthru
      _
    // Predicated region
    $region34: #{tpu_custom_call.1} parent=1 // pred_check
      _
    $region35: #{tpu_custom_call.1} parent=1 // pred_check_branch
      %104 = sbr.rel (0) target = $region37
    $region36: #{tpu_custom_call.1} parent=1 // pred_region
      %s106 = ssub.s32 2048, 2048
      %107 = vsyncadd [#allocation12], %s106
      %s108 = sshll.u32 [#allocation13], 4
      %s109 = int_to_ptr.vmem [resolvable:$true] %s108
      %114 = dma.hbm_to_vmem [thread:$0]  %s8, 2048, %s109, [#allocation12], 128, 128, 8
    $region37: #{tpu_custom_call.1} parent=1 // pred_fallthru
      _
    // Predicated region
    $region38: #{tpu_custom_call.1} parent=1 // pred_check
      _
    $region39: #{tpu_custom_call.1} parent=1 // pred_check_branch
      %116 = sbr.rel (0) target = $region41
    $region40: #{tpu_custom_call.1} parent=1 // pred_region
      %s118 = ssub.s32 2048, 2048
      %119 = vsyncadd [#allocation15], %s118
      %s120 = sshll.u32 [#allocation14], 4
      %s121 = int_to_ptr.vmem [resolvable:$true] %s120
      %126 = dma.hbm_to_vmem [thread:$0]  %s9, 2048, %s121, [#allocation15], 128, 128, 8
    $region41: #{tpu_custom_call.1} parent=1 // pred_fallthru
      _
    // Predicated region
    $region42: #{tpu_custom_call.1} parent=1 // pred_check
      _
    $region43: #{tpu_custom_call.1} parent=1 // pred_check_branch
      %128 = sbr.rel (0) target = $region45
    $region44: #{tpu_custom_call.1} parent=1 // pred_region
      _
    $region45: #{tpu_custom_call.1} parent=1 // pred_fallthru
      _
    // Predicated region
    $region46: #{tpu_custom_call.1} parent=1 // pred_check
      _
    $region47: #{tpu_custom_call.1} parent=1 // pred_check_branch
      %130 = sbr.rel (0) target = $region49
    $region48: #{tpu_custom_call.1} parent=1 // pred_region
      %s132 = ssub.s32 2048, 2048
      %133 = vsyncadd [#allocation15], %s132
      %s134 = sshll.u32 [#allocation16], 4
      %s135 = int_to_ptr.vmem [resolvable:$true] %s134
      %140 = dma.hbm_to_vmem [thread:$0]  %s11, 2048, %s135, [#allocation15], 128, 128, 8
    $region49: #{tpu_custom_call.1} parent=1 // pred_fallthru
      _
    // Predicated region
    $region50: #{tpu_custom_call.1} parent=1 // pred_check
      _
    $region51: #{tpu_custom_call.1} parent=1 // pred_check_branch
      %142 = sbr.rel (0) target = $region53
    $region52: #{tpu_custom_call.1} parent=1 // pred_region
      %s144 = ssub.s32 2048, 2048
      %145 = vsyncadd [#allocation18], %s144
      %s146 = sshll.u32 [#allocation17], 4
      %s147 = int_to_ptr.vmem [resolvable:$true] %s146
      %152 = dma.hbm_to_vmem [thread:$0]  %s12, 2048, %s147, [#allocation18], 128, 128, 8
    $region53: #{tpu_custom_call.1} parent=1 // pred_fallthru
      _
    // Predicated region
    $region54: #{tpu_custom_call.1} parent=1 // pred_check
      _
    $region55: #{tpu_custom_call.1} parent=1 // pred_check_branch
      %154 = sbr.rel (0) target = $region57
    $region56: #{tpu_custom_call.1} parent=1 // pred_region
      _
    $region57: #{tpu_custom_call.1} parent=1 // pred_fallthru
      _
    // Predicated region
    $region58: #{tpu_custom_call.1} parent=1 // pred_check
      _
    $region59: #{tpu_custom_call.1} parent=1 // pred_check_branch
      %156 = sbr.rel (0) target = $region61
    $region60: #{tpu_custom_call.1} parent=1 // pred_region
      %s158 = ssub.s32 2048, 2048
      %159 = vsyncadd [#allocation18], %s158
      %s160 = sshll.u32 [#allocation19], 4
      %s161 = int_to_ptr.vmem [resolvable:$true] %s160
      %166 = dma.hbm_to_vmem [thread:$0]  %s14, 2048, %s161, [#allocation18], 128, 128, 8
    $region61: #{tpu_custom_call.1} parent=1 // pred_fallthru
      _
    // Predicated region
    $region62: #{tpu_custom_call.1} parent=1 // pred_check
      _
    $region63: #{tpu_custom_call.1} parent=1 // pred_check_branch
      %168 = sbr.rel (0) target = $region65
    $region64: #{tpu_custom_call.1} parent=1 // pred_region
      %169 = dma.done [#allocation3], 1024
    $region65: #{tpu_custom_call.1} parent=1 // pred_fallthru
      _
    // Predicated region
    $region66: #{tpu_custom_call.1} parent=1 // pred_check
      _
    $region67: #{tpu_custom_call.1} parent=1 // pred_check_branch
      %171 = sbr.rel (0) target = $region69
    $region68: #{tpu_custom_call.1} parent=1 // pred_region
      %172 = dma.done [#allocation6], 1024
    $region69: #{tpu_custom_call.1} parent=1 // pred_fallthru
      _
    // Predicated region
    $region70: #{tpu_custom_call.1} parent=1 // pred_check
      _
    $region71: #{tpu_custom_call.1} parent=1 // pred_check_branch
      %174 = sbr.rel (0) target = $region73
    $region72: #{tpu_custom_call.1} parent=1 // pred_region
      %175 = dma.done [#allocation6], 128
    $region73: #{tpu_custom_call.1} parent=1 // pred_fallthru
      _
    // Predicated region
    $region74: #{tpu_custom_call.1} parent=1 // pred_check
      _
    $region75: #{tpu_custom_call.1} parent=1 // pred_check_branch
      %177 = sbr.rel (0) target = $region77
    $region76: #{tpu_custom_call.1} parent=1 // pred_region
      %178 = dma.done [#allocation9], 6144
    $region77: #{tpu_custom_call.1} parent=1 // pred_fallthru
      _
    // Predicated region
    $region78: #{tpu_custom_call.1} parent=1 // pred_check
      _
    $region79: #{tpu_custom_call.1} parent=1 // pred_check_branch
      %180 = sbr.rel (0) target = $region81
    $region80: #{tpu_custom_call.1} parent=1 // pred_region
      %181 = dma.done [#allocation9], 6144
    $region81: #{tpu_custom_call.1} parent=1 // pred_fallthru
      _
    // Predicated region
    $region82: #{tpu_custom_call.1} parent=1 // pred_check
      _
    $region83: #{tpu_custom_call.1} parent=1 // pred_check_branch
      %183 = sbr.rel (0) target = $region85
    $region84: #{tpu_custom_call.1} parent=1 // pred_region
      %184 = dma.done [#allocation12], 2048
    $region85: #{tpu_custom_call.1} parent=1 // pred_fallthru
      _
    // Predicated region
    $region86: #{tpu_custom_call.1} parent=1 // pred_check
      _
    $region87: #{tpu_custom_call.1} parent=1 // pred_check_branch
      %186 = sbr.rel (0) target = $region89
    $region88: #{tpu_custom_call.1} parent=1 // pred_region
      %187 = dma.done [#allocation12], 2048
    $region89: #{tpu_custom_call.1} parent=1 // pred_fallthru
      _
    // Predicated region
    $region90: #{tpu_custom_call.1} parent=1 // pred_check
      _
    $region91: #{tpu_custom_call.1} parent=1 // pred_check_branch
      %189 = sbr.rel (0) target = $region93
    $region92: #{tpu_custom_call.1} parent=1 // pred_region
      %190 = dma.done [#allocation15], 2048
    $region93: #{tpu_custom_call.1} parent=1 // pred_fallthru
      _
    // Predicated region
    $region94: #{tpu_custom_call.1} parent=1 // pred_check
      _
    $region95: #{tpu_custom_call.1} parent=1 // pred_check_branch
      %192 = sbr.rel (0) target = $region97
    $region96: #{tpu_custom_call.1} parent=1 // pred_region
      %193 = dma.done [#allocation15], 2048
    $region97: #{tpu_custom_call.1} parent=1 // pred_fallthru
      _
    // Predicated region
    $region98: #{tpu_custom_call.1} parent=1 // pred_check
      _
    $region99: #{tpu_custom_call.1} parent=1 // pred_check_branch
      %195 = sbr.rel (0) target = $region101
    $region100: #{tpu_custom_call.1} parent=1 // pred_region
      %196 = dma.done [#allocation18], 2048
    $region101: #{tpu_custom_call.1} parent=1 // pred_fallthru
      _
    // Predicated region
    $region102: #{tpu_custom_call.1} parent=1 // pred_check
      _
    $region103: #{tpu_custom_call.1} parent=1 // pred_check_branch
      %198 = sbr.rel (0) target = $region105
    $region104: #{tpu_custom_call.1} parent=1 // pred_region
      %199 = dma.done [#allocation18], 2048
    $region105: #{tpu_custom_call.1} parent=1 // pred_fallthru
      _
    %v200 = vld [vmem:[#allocation5] sm:$0xff]
    %v201 = vld [vmem:[#allocation5 + $0x8] sm:$0xff]
    %v202 = vld [vmem:[#allocation5 + $0x10] sm:$0xff]
    %v203 = vld [vmem:[#allocation5 + $0x18] sm:$0xff]
    %v204 = vld [vmem:[#allocation5 + $0x20] sm:$0xff]
    %v205 = vld [vmem:[#allocation5 + $0x28] sm:$0xff]
    %v206 = vld [vmem:[#allocation5 + $0x30] sm:$0xff]
    %v207 = vld [vmem:[#allocation5 + $0x38] sm:$0xff]
    %v208 = vld [vmem:[#allocation2] sm:$0xff]
    %v209 = vld [vmem:[#allocation2 + $0x8] sm:$0xff]
    %v210 = vld [vmem:[#allocation2 + $0x10] sm:$0xff]
    %v211 = vld [vmem:[#allocation2 + $0x18] sm:$0xff]
    %v212 = vld [vmem:[#allocation2 + $0x20] sm:$0xff]
    %v213 = vld [vmem:[#allocation2 + $0x28] sm:$0xff]
    %v214 = vld [vmem:[#allocation2 + $0x30] sm:$0xff]
    %v215 = vld [vmem:[#allocation2 + $0x38] sm:$0xff]
    %v216 = vld [vmem:[#allocation8] sm:$0xff]
    %v217 = vld [vmem:[#allocation8 + $0x8] sm:$0xff]
    %v218 = vld [vmem:[#allocation8 + $0x10] sm:$0xff]
    %v219 = vld [vmem:[#allocation8 + $0x18] sm:$0xff]
    %v220 = vld [vmem:[#allocation8 + $0x20] sm:$0xff]
    %v221 = vld [vmem:[#allocation8 + $0x28] sm:$0xff]
    %v222 = vld [vmem:[#allocation8 + $0x30] sm:$0xff]
    %v223 = vld [vmem:[#allocation8 + $0x38] sm:$0xff]
    %v224 = vld [vmem:[#allocation8 + $0x40] sm:$0xff]
    %v225 = vld [vmem:[#allocation8 + $0x48] sm:$0xff]
    %v226 = vld [vmem:[#allocation8 + $0x50] sm:$0xff]
    %v227 = vld [vmem:[#allocation8 + $0x58] sm:$0xff]
    %v228 = vld [vmem:[#allocation8 + $0x60] sm:$0xff]
    %v229 = vld [vmem:[#allocation8 + $0x68] sm:$0xff]
    %v230 = vld [vmem:[#allocation8 + $0x70] sm:$0xff]
    %v231 = vld [vmem:[#allocation8 + $0x78] sm:$0xff]
    %v232 = vld [vmem:[#allocation10] sm:$0xff]
    %v233 = vld [vmem:[#allocation10 + $0x8] sm:$0xff]
    %v234 = vld [vmem:[#allocation10 + $0x10] sm:$0xff]
    %v235 = vld [vmem:[#allocation10 + $0x18] sm:$0xff]
    %v236 = vld [vmem:[#allocation10 + $0x20] sm:$0xff]
    %v237 = vld [vmem:[#allocation10 + $0x28] sm:$0xff]
    %v238 = vld [vmem:[#allocation10 + $0x30] sm:$0xff]
    %v239 = vld [vmem:[#allocation10 + $0x38] sm:$0xff]
    %v240 = vld [vmem:[#allocation10 + $0x40] sm:$0xff]
    %v241 = vld [vmem:[#allocation10 + $0x48] sm:$0xff]
    %v242 = vld [vmem:[#allocation10 + $0x50] sm:$0xff]
    %v243 = vld [vmem:[#allocation10 + $0x58] sm:$0xff]
    %v244 = vld [vmem:[#allocation10 + $0x60] sm:$0xff]
    %v245 = vld [vmem:[#allocation10 + $0x68] sm:$0xff]
    %v246 = vld [vmem:[#allocation10 + $0x70] sm:$0xff]
    %v247 = vld [vmem:[#allocation10 + $0x78] sm:$0xff]
    %248 = vmatprep.subr.mxu0 0.0
    %249 = vmatpush1.msra.mxu0 %v231
    %250 = vmatprep.subr.mxu0 0.0
    %251 = vmatpush1.msra.mxu0 %v230
    %252 = vmatprep.subr.mxu0 0.0
    %253 = vmatpush1.msra.mxu0 %v229
    %254 = vmatprep.subr.mxu0 0.0
    %255 = vmatpush1.msra.mxu0 %v228
    %256 = vmatprep.subr.mxu0 0.0
    %257 = vmatpush1.msra.mxu0 %v227
    %258 = vmatprep.subr.mxu0 0.0
    %259 = vmatpush1.msra.mxu0 %v226
    %260 = vmatprep.subr.mxu0 0.0
    %261 = vmatpush1.msra.mxu0 %v225
    %262 = vmatprep.subr.mxu0 0.0
    %263 = vmatpush1.msra.mxu0 %v224
    %264 = vmatprep.subr.mxu0 0.0
    %265 = vmatpush1.msra.mxu0 %v223
    %266 = vmatprep.subr.mxu0 0.0
    %267 = vmatpush1.msra.mxu0 %v222
    %268 = vmatprep.subr.mxu0 0.0
    %269 = vmatpush1.msra.mxu0 %v221
    %270 = vmatprep.subr.mxu0 0.0
    %271 = vmatpush1.msra.mxu0 %v220
    %272 = vmatprep.subr.mxu0 0.0
    %273 = vmatpush1.msra.mxu0 %v219
    %274 = vmatprep.subr.mxu0 0.0
    %275 = vmatpush1.msra.mxu0 %v218
    %276 = vmatprep.subr.mxu0 0.0
    %277 = vmatpush1.msra.mxu0 %v217
    %278 = vmatprep.subr.mxu0 0.0
    %279 = vmatpush1.msra.mxu0 %v216
    %280 = vmatprep.subr.mxu0 0.0
    %281 = vmatpush2.msra.mxu0 0.0
    %282 = vmatprep.subr.mxu0 0.0
    %283 = vmatpush2.msra.mxu0 0.0
    %284 = vmatprep.subr.mxu0 0.0
    %285 = vmatpush2.msra.mxu0 0.0
    %286 = vmatprep.subr.mxu0 0.0
    %287 = vmatpush2.msra.mxu0 0.0
    %288 = vmatprep.subr.mxu0 0.0
    %289 = vmatpush2.msra.mxu0 0.0
    %290 = vmatprep.subr.mxu0 0.0
    %291 = vmatpush2.msra.mxu0 0.0
    %292 = vmatprep.subr.mxu0 0.0
    %293 = vmatpush2.msra.mxu0 0.0
    %294 = vmatprep.subr.mxu0 0.0
    %295 = vmatpush2.msra.mxu0 0.0
    %296 = vmatprep.subr.mxu0 0.0
    %297 = vmatpush2.msra.mxu0 0.0
    %298 = vmatprep.subr.mxu0 0.0
    %299 = vmatpush2.msra.mxu0 0.0
    %300 = vmatprep.subr.mxu0 0.0
    %301 = vmatpush2.msra.mxu0 0.0
    %302 = vmatprep.subr.mxu0 0.0
    %303 = vmatpush2.msra.mxu0 0.0
    %304 = vmatprep.subr.mxu0 0.0
    %305 = vmatpush2.msra.mxu0 0.0
    %306 = vmatprep.subr.mxu0 0.0
    %307 = vmatpush2.msra.mxu0 0.0
    %308 = vmatprep.subr.mxu0 0.0
    %309 = vmatpush2.msra.mxu0 0.0
    %310 = vmatprep.subr.mxu0 0.0
    %311 = vmatpush2.msra.mxu0 0.0
    %312 = vmatprep.mubr.f32.mxu0 0.0
    %313 = vmatmul.mubr.f32.gmra.mxu0 %v208
    %v314 = vpop.f32.mrf.mxu0
    %v315 = vadd.f32 0.0, %v314
    %v316 = vpop.f32.mrf.mxu0
    %317 = vmatprep.mubr.f32.mxu0 0.0
    %318 = vmatmul.mubr.f32.gmra.mxu0 %v209
    %v319 = vpop.f32.mrf.mxu0
    %v320 = vadd.f32 0.0, %v319
    %v321 = vpop.f32.mrf.mxu0
    %322 = vmatprep.mubr.f32.mxu0 0.0
    %323 = vmatmul.mubr.f32.gmra.mxu0 %v210
    %v324 = vpop.f32.mrf.mxu0
    %v325 = vadd.f32 0.0, %v324
    %v326 = vpop.f32.mrf.mxu0
    %327 = vmatprep.mubr.f32.mxu0 0.0
    %328 = vmatmul.mubr.f32.gmra.mxu0 %v211
    %v329 = vpop.f32.mrf.mxu0
    %v330 = vadd.f32 0.0, %v329
    %v331 = vpop.f32.mrf.mxu0
    %332 = vmatprep.mubr.f32.mxu0 0.0
    %333 = vmatmul.mubr.f32.gmra.mxu0 %v212
    %v334 = vpop.f32.mrf.mxu0
    %v335 = vadd.f32 0.0, %v334
    %v336 = vpop.f32.mrf.mxu0
    %337 = vmatprep.mubr.f32.mxu0 0.0
    %338 = vmatmul.mubr.f32.gmra.mxu0 %v213
    %v339 = vpop.f32.mrf.mxu0
    %v340 = vadd.f32 0.0, %v339
    %v341 = vpop.f32.mrf.mxu0
    %342 = vmatprep.mubr.f32.mxu0 0.0
    %343 = vmatmul.mubr.f32.gmra.mxu0 %v214
    %v344 = vpop.f32.mrf.mxu0
    %v345 = vadd.f32 0.0, %v344
    %v346 = vpop.f32.mrf.mxu0
    %347 = vmatprep.mubr.f32.mxu0 0.0
    %348 = vmatmul.mubr.f32.gmra.mxu0 %v215
    %v349 = vpop.f32.mrf.mxu0
    %v350 = vadd.f32 0.0, %v349
    %v351 = vpop.f32.mrf.mxu0
    %352 = vdwg.mxu0
    %353 = vmatprep.subr.mxu0 0.0
    %354 = vmatpush1.msra.mxu0 %v247
    %355 = vmatprep.subr.mxu0 0.0
    %356 = vmatpush1.msra.mxu0 %v246
    %357 = vmatprep.subr.mxu0 0.0
    %358 = vmatpush1.msra.mxu0 %v245
    %359 = vmatprep.subr.mxu0 0.0
    %360 = vmatpush1.msra.mxu0 %v244
    %361 = vmatprep.subr.mxu0 0.0
    %362 = vmatpush1.msra.mxu0 %v243
    %363 = vmatprep.subr.mxu0 0.0
    %364 = vmatpush1.msra.mxu0 %v242
    %365 = vmatprep.subr.mxu0 0.0
    %366 = vmatpush1.msra.mxu0 %v241
    %367 = vmatprep.subr.mxu0 0.0
    %368 = vmatpush1.msra.mxu0 %v240
    %369 = vmatprep.subr.mxu0 0.0
    %370 = vmatpush1.msra.mxu0 %v239
    %371 = vmatprep.subr.mxu0 0.0
    %372 = vmatpush1.msra.mxu0 %v238
    %373 = vmatprep.subr.mxu0 0.0
    %374 = vmatpush1.msra.mxu0 %v237
    %375 = vmatprep.subr.mxu0 0.0
    %376 = vmatpush1.msra.mxu0 %v236
    %377 = vmatprep.subr.mxu0 0.0
    %378 = vmatpush1.msra.mxu0 %v235
    %379 = vmatprep.subr.mxu0 0.0
    %380 = vmatpush1.msra.mxu0 %v234
    %381 = vmatprep.subr.mxu0 0.0
    %382 = vmatpush1.msra.mxu0 %v233
    %383 = vmatprep.subr.mxu0 0.0
    %384 = vmatpush1.msra.mxu0 %v232
    %385 = vmatprep.subr.mxu0 0.0
    %386 = vmatpush2.msra.mxu0 0.0
    %387 = vmatprep.subr.mxu0 0.0
    %388 = vmatpush2.msra.mxu0 0.0
    %389 = vmatprep.subr.mxu0 0.0
    %390 = vmatpush2.msra.mxu0 0.0
    %391 = vmatprep.subr.mxu0 0.0
    %392 = vmatpush2.msra.mxu0 0.0
    %393 = vmatprep.subr.mxu0 0.0
    %394 = vmatpush2.msra.mxu0 0.0
    %395 = vmatprep.subr.mxu0 0.0
    %396 = vmatpush2.msra.mxu0 0.0
    %397 = vmatprep.subr.mxu0 0.0
    %398 = vmatpush2.msra.mxu0 0.0
    %399 = vmatprep.subr.mxu0 0.0
    %400 = vmatpush2.msra.mxu0 0.0
    %401 = vmatprep.subr.mxu0 0.0
    %402 = vmatpush2.msra.mxu0 0.0
    %403 = vmatprep.subr.mxu0 0.0
    %404 = vmatpush2.msra.mxu0 0.0
    %405 = vmatprep.subr.mxu0 0.0
    %406 = vmatpush2.msra.mxu0 0.0
    %407 = vmatprep.subr.mxu0 0.0
    %408 = vmatpush2.msra.mxu0 0.0
    %409 = vmatprep.subr.mxu0 0.0
    %410 = vmatpush2.msra.mxu0 0.0
    %411 = vmatprep.subr.mxu0 0.0
    %412 = vmatpush2.msra.mxu0 0.0
    %413 = vmatprep.subr.mxu0 0.0
    %414 = vmatpush2.msra.mxu0 0.0
    %415 = vmatprep.subr.mxu0 0.0
    %416 = vmatpush2.msra.mxu0 0.0
    %417 = vmatprep.mubr.f32.mxu0 0.0
    %418 = vmatmul.mubr.f32.gmra.mxu0 %v208
    %v419 = vpop.f32.mrf.mxu0
    %v420 = vadd.f32 0.0, %v419
    %v421 = vpop.f32.mrf.mxu0
    %422 = vmatprep.mubr.f32.mxu0 0.0
    %423 = vmatmul.mubr.f32.gmra.mxu0 %v209
    %v424 = vpop.f32.mrf.mxu0
    %v425 = vadd.f32 0.0, %v424
    %v426 = vpop.f32.mrf.mxu0
    %427 = vmatprep.mubr.f32.mxu0 0.0
    %428 = vmatmul.mubr.f32.gmra.mxu0 %v210
    %v429 = vpop.f32.mrf.mxu0
    %v430 = vadd.f32 0.0, %v429
    %v431 = vpop.f32.mrf.mxu0
    %432 = vmatprep.mubr.f32.mxu0 0.0
    %433 = vmatmul.mubr.f32.gmra.mxu0 %v211
    %v434 = vpop.f32.mrf.mxu0
    %v435 = vadd.f32 0.0, %v434
    %v436 = vpop.f32.mrf.mxu0
    %437 = vmatprep.mubr.f32.mxu0 0.0
    %438 = vmatmul.mubr.f32.gmra.mxu0 %v212
    %v439 = vpop.f32.mrf.mxu0
    %v440 = vadd.f32 0.0, %v439
    %v441 = vpop.f32.mrf.mxu0
    %442 = vmatprep.mubr.f32.mxu0 0.0
    %443 = vmatmul.mubr.f32.gmra.mxu0 %v213
    %v444 = vpop.f32.mrf.mxu0
    %v445 = vadd.f32 0.0, %v444
    %v446 = vpop.f32.mrf.mxu0
    %447 = vmatprep.mubr.f32.mxu0 0.0
    %448 = vmatmul.mubr.f32.gmra.mxu0 %v214
    %v449 = vpop.f32.mrf.mxu0
    %v450 = vadd.f32 0.0, %v449
    %v451 = vpop.f32.mrf.mxu0
    %452 = vmatprep.mubr.f32.mxu0 0.0
    %453 = vmatmul.mubr.f32.gmra.mxu0 %v215
    %v454 = vpop.f32.mrf.mxu0
    %v455 = vadd.f32 0.0, %v454
    %v456 = vpop.f32.mrf.mxu0
    %457 = vdwg.mxu0
    %vm458 = vcmask 523264
    %v460 = vsel %vm458, %v200, 0
    %v463 = vsel %vm458, %v201, 0
    %v466 = vsel %vm458, %v202, 0
    %v469 = vsel %vm458, %v203, 0
    %v472 = vsel %vm458, %v204, 0
    %v475 = vsel %vm458, %v205, 0
    %v478 = vsel %vm458, %v206, 0
    %v481 = vsel %vm458, %v207, 0
    %483 = vmatprep.subr.mxu0 0.0
    %484 = vmatpush1.msra.mxu0 0.0
    %485 = vmatprep.subr.mxu0 0.0
    %486 = vmatpush1.msra.mxu0 0.0
    %487 = vmatprep.subr.mxu0 0.0
    %488 = vmatpush1.msra.mxu0 0.0
    %489 = vmatprep.subr.mxu0 0.0
    %490 = vmatpush1.msra.mxu0 0.0
    %491 = vmatprep.subr.mxu0 0.0
    %492 = vmatpush1.msra.mxu0 0.0
    %493 = vmatprep.subr.mxu0 0.0
    %494 = vmatpush1.msra.mxu0 0.0
    %495 = vmatprep.subr.mxu0 0.0
    %496 = vmatpush1.msra.mxu0 0.0
    %497 = vmatprep.subr.mxu0 0.0
    %498 = vmatpush1.msra.mxu0 0.0
    %499 = vmatprep.subr.mxu0 0.0
    %500 = vmatpush1.msra.mxu0 %v350
    %501 = vmatprep.subr.mxu0 0.0
    %502 = vmatpush1.msra.mxu0 %v345
    %503 = vmatprep.subr.mxu0 0.0
    %504 = vmatpush1.msra.mxu0 %v340
    %505 = vmatprep.subr.mxu0 0.0
    %506 = vmatpush1.msra.mxu0 %v335
    %507 = vmatprep.subr.mxu0 0.0
    %508 = vmatpush1.msra.mxu0 %v330
    %509 = vmatprep.subr.mxu0 0.0
    %510 = vmatpush1.msra.mxu0 %v325
    %511 = vmatprep.subr.mxu0 0.0
    %512 = vmatpush1.msra.mxu0 %v320
    %513 = vmatprep.subr.mxu0 0.0
    %514 = vmatpush1.msra.mxu0 %v315
    %515 = vmatprep.subr.mxu0 0.0
    %516 = vmatpush2.msra.mxu0 0.0
    %517 = vmatprep.subr.mxu0 0.0
    %518 = vmatpush2.msra.mxu0 0.0
    %519 = vmatprep.subr.mxu0 0.0
    %520 = vmatpush2.msra.mxu0 0.0
    %521 = vmatprep.subr.mxu0 0.0
    %522 = vmatpush2.msra.mxu0 0.0
    %523 = vmatprep.subr.mxu0 0.0
    %524 = vmatpush2.msra.mxu0 0.0
    %525 = vmatprep.subr.mxu0 0.0
    %526 = vmatpush2.msra.mxu0 0.0
    %527 = vmatprep.subr.mxu0 0.0
    %528 = vmatpush2.msra.mxu0 0.0
    %529 = vmatprep.subr.mxu0 0.0
    %530 = vmatpush2.msra.mxu0 0.0
    %531 = vmatprep.subr.mxu0 0.0
    %532 = vmatpush2.msra.mxu0 0.0
    %533 = vmatprep.subr.mxu0 0.0
    %534 = vmatpush2.msra.mxu0 0.0
    %535 = vmatprep.subr.mxu0 0.0
    %536 = vmatpush2.msra.mxu0 0.0
    %537 = vmatprep.subr.mxu0 0.0
    %538 = vmatpush2.msra.mxu0 0.0
    %539 = vmatprep.subr.mxu0 0.0
    %540 = vmatpush2.msra.mxu0 0.0
    %541 = vmatprep.subr.mxu0 0.0
    %542 = vmatpush2.msra.mxu0 0.0
    %543 = vmatprep.subr.mxu0 0.0
    %544 = vmatpush2.msra.mxu0 0.0
    %545 = vmatprep.subr.mxu0 0.0
    %546 = vmatpush2.msra.mxu0 0.0
    %547 = vmatprep.mubr.f32.mxu0 0.0
    %548 = vmatmul.mubr.f32.gmra.mxu0 %v460
    %v549 = vpop.f32.mrf.mxu0
    %v550 = vadd.f32 %v420, %v549
    %v551 = vpop.f32.mrf.mxu0
    %552 = vmatprep.mubr.f32.mxu0 0.0
    %553 = vmatmul.mubr.f32.gmra.mxu0 %v463
    %v554 = vpop.f32.mrf.mxu0
    %v555 = vadd.f32 %v425, %v554
    %v556 = vpop.f32.mrf.mxu0
    %557 = vmatprep.mubr.f32.mxu0 0.0
    %558 = vmatmul.mubr.f32.gmra.mxu0 %v466
    %v559 = vpop.f32.mrf.mxu0
    %v560 = vadd.f32 %v430, %v559
    %v561 = vpop.f32.mrf.mxu0
    %562 = vmatprep.mubr.f32.mxu0 0.0
    %563 = vmatmul.mubr.f32.gmra.mxu0 %v469
    %v564 = vpop.f32.mrf.mxu0
    %v565 = vadd.f32 %v435, %v564
    %v566 = vpop.f32.mrf.mxu0
    %567 = vmatprep.mubr.f32.mxu0 0.0
    %568 = vmatmul.mubr.f32.gmra.mxu0 %v472
    %v569 = vpop.f32.mrf.mxu0
    %v570 = vadd.f32 %v440, %v569
    %v571 = vpop.f32.mrf.mxu0
    %572 = vmatprep.mubr.f32.mxu0 0.0
    %573 = vmatmul.mubr.f32.gmra.mxu0 %v475
    %v574 = vpop.f32.mrf.mxu0
    %v575 = vadd.f32 %v445, %v574
    %v576 = vpop.f32.mrf.mxu0
    %577 = vmatprep.mubr.f32.mxu0 0.0
    %578 = vmatmul.mubr.f32.gmra.mxu0 %v478
    %v579 = vpop.f32.mrf.mxu0
    %v580 = vadd.f32 %v450, %v579
    %v581 = vpop.f32.mrf.mxu0
    %582 = vmatprep.mubr.f32.mxu0 0.0
    %583 = vmatmul.mubr.f32.gmra.mxu0 %v481
    %v584 = vpop.f32.mrf.mxu0
    %v585 = vadd.f32 %v455, %v584
    %v586 = vpop.f32.mrf.mxu0
    %587 = vdwg.mxu0
    %v588 = vld [vmem:[%s5] sm:$0x1]
    %v590 = vlaneseq
    %v591 = vshrl.u32 %v590, 7
    %v592 = vsub.s32 0, %v591
    %v593 = vrot.slane %v588, %v592
    %v595 = vadd.f32 %v550, %v593
    %v596 = vadd.f32 %v555, %v593
    %v597 = vadd.f32 %v560, %v593
    %v598 = vadd.f32 %v565, %v593
    %v599 = vadd.f32 %v570, %v593
    %v600 = vadd.f32 %v575, %v593
    %v601 = vadd.f32 %v580, %v593
    %v602 = vadd.f32 %v585, %v593
    %v603 = vmax.f32 %v595, 0.0
    %v604 = vmax.f32 %v596, 0.0
    %v605 = vmax.f32 %v597, 0.0
    %v606 = vmax.f32 %v598, 0.0
    %v607 = vmax.f32 %v599, 0.0
    %v608 = vmax.f32 %v600, 0.0
    %v609 = vmax.f32 %v601, 0.0
    %v610 = vmax.f32 %v602, 0.0
    %s611 = scalar_lea.vmem [#allocation8], 128
    %v612 = vld [vmem:[%s611] sm:$0xff]
    %v613 = vld [vmem:[%s611 + $0x8] sm:$0xff]
    %v614 = vld [vmem:[%s611 + $0x10] sm:$0xff]
    %v615 = vld [vmem:[%s611 + $0x18] sm:$0xff]
    %v616 = vld [vmem:[%s611 + $0x20] sm:$0xff]
    %v617 = vld [vmem:[%s611 + $0x28] sm:$0xff]
    %v618 = vld [vmem:[%s611 + $0x30] sm:$0xff]
    %v619 = vld [vmem:[%s611 + $0x38] sm:$0xff]
    %v620 = vld [vmem:[%s611 + $0x40] sm:$0xff]
    %v621 = vld [vmem:[%s611 + $0x48] sm:$0xff]
    %v622 = vld [vmem:[%s611 + $0x50] sm:$0xff]
    %v623 = vld [vmem:[%s611 + $0x58] sm:$0xff]
    %v624 = vld [vmem:[%s611 + $0x60] sm:$0xff]
    %v625 = vld [vmem:[%s611 + $0x68] sm:$0xff]
    %v626 = vld [vmem:[%s611 + $0x70] sm:$0xff]
    %v627 = vld [vmem:[%s611 + $0x78] sm:$0xff]
    %s628 = scalar_lea.vmem [#allocation10], 128
    %v629 = vld [vmem:[%s628] sm:$0xff]
    %v630 = vld [vmem:[%s628 + $0x8] sm:$0xff]
    %v631 = vld [vmem:[%s628 + $0x10] sm:$0xff]
    %v632 = vld [vmem:[%s628 + $0x18] sm:$0xff]
    %v633 = vld [vmem:[%s628 + $0x20] sm:$0xff]
    %v634 = vld [vmem:[%s628 + $0x28] sm:$0xff]
    %v635 = vld [vmem:[%s628 + $0x30] sm:$0xff]
    %v636 = vld [vmem:[%s628 + $0x38] sm:$0xff]
    %v637 = vld [vmem:[%s628 + $0x40] sm:$0xff]
    %v638 = vld [vmem:[%s628 + $0x48] sm:$0xff]
    %v639 = vld [vmem:[%s628 + $0x50] sm:$0xff]
    %v640 = vld [vmem:[%s628 + $0x58] sm:$0xff]
    %v641 = vld [vmem:[%s628 + $0x60] sm:$0xff]
    %v642 = vld [vmem:[%s628 + $0x68] sm:$0xff]
    %v643 = vld [vmem:[%s628 + $0x70] sm:$0xff]
    %v644 = vld [vmem:[%s628 + $0x78] sm:$0xff]
    %645 = vmatprep.subr.mxu0 0.0
    %646 = vmatpush1.msra.mxu0 %v627
    %647 = vmatprep.subr.mxu0 0.0
    %648 = vmatpush1.msra.mxu0 %v626
    %649 = vmatprep.subr.mxu0 0.0
    %650 = vmatpush1.msra.mxu0 %v625
    %651 = vmatprep.subr.mxu0 0.0
    %652 = vmatpush1.msra.mxu0 %v624
    %653 = vmatprep.subr.mxu0 0.0
    %654 = vmatpush1.msra.mxu0 %v623
    %655 = vmatprep.subr.mxu0 0.0
    %656 = vmatpush1.msra.mxu0 %v622
    %657 = vmatprep.subr.mxu0 0.0
    %658 = vmatpush1.msra.mxu0 %v621
    %659 = vmatprep.subr.mxu0 0.0
    %660 = vmatpush1.msra.mxu0 %v620
    %661 = vmatprep.subr.mxu0 0.0
    %662 = vmatpush1.msra.mxu0 %v619
    %663 = vmatprep.subr.mxu0 0.0
    %664 = vmatpush1.msra.mxu0 %v618
    %665 = vmatprep.subr.mxu0 0.0
    %666 = vmatpush1.msra.mxu0 %v617
    %667 = vmatprep.subr.mxu0 0.0
    %668 = vmatpush1.msra.mxu0 %v616
    %669 = vmatprep.subr.mxu0 0.0
    %670 = vmatpush1.msra.mxu0 %v615
    %671 = vmatprep.subr.mxu0 0.0
    %672 = vmatpush1.msra.mxu0 %v614
    %673 = vmatprep.subr.mxu0 0.0
    %674 = vmatpush1.msra.mxu0 %v613
    %675 = vmatprep.subr.mxu0 0.0
    %676 = vmatpush1.msra.mxu0 %v612
    %677 = vmatprep.subr.mxu0 0.0
    %678 = vmatpush2.msra.mxu0 0.0
    %679 = vmatprep.subr.mxu0 0.0
    %680 = vmatpush2.msra.mxu0 0.0
    %681 = vmatprep.subr.mxu0 0.0
    %682 = vmatpush2.msra.mxu0 0.0
    %683 = vmatprep.subr.mxu0 0.0
    %684 = vmatpush2.msra.mxu0 0.0
    %685 = vmatprep.subr.mxu0 0.0
    %686 = vmatpush2.msra.mxu0 0.0
    %687 = vmatprep.subr.mxu0 0.0
    %688 = vmatpush2.msra.mxu0 0.0
    %689 = vmatprep.subr.mxu0 0.0
    %690 = vmatpush2.msra.mxu0 0.0
    %691 = vmatprep.subr.mxu0 0.0
    %692 = vmatpush2.msra.mxu0 0.0
    %693 = vmatprep.subr.mxu0 0.0
    %694 = vmatpush2.msra.mxu0 0.0
    %695 = vmatprep.subr.mxu0 0.0
    %696 = vmatpush2.msra.mxu0 0.0
    %697 = vmatprep.subr.mxu0 0.0
    %698 = vmatpush2.msra.mxu0 0.0
    %699 = vmatprep.subr.mxu0 0.0
    %700 = vmatpush2.msra.mxu0 0.0
    %701 = vmatprep.subr.mxu0 0.0
    %702 = vmatpush2.msra.mxu0 0.0
    %703 = vmatprep.subr.mxu0 0.0
    %704 = vmatpush2.msra.mxu0 0.0
    %705 = vmatprep.subr.mxu0 0.0
    %706 = vmatpush2.msra.mxu0 0.0
    %707 = vmatprep.subr.mxu0 0.0
    %708 = vmatpush2.msra.mxu0 0.0
    %709 = vmatprep.mubr.f32.mxu0 0.0
    %710 = vmatmul.mubr.f32.gmra.mxu0 %v603
    %v711 = vpop.f32.mrf.mxu0
    %v712 = vadd.f32 0.0, %v711
    %v713 = vpop.f32.mrf.mxu0
    %714 = vmatprep.mubr.f32.mxu0 0.0
    %715 = vmatmul.mubr.f32.gmra.mxu0 %v604
    %v716 = vpop.f32.mrf.mxu0
    %v717 = vadd.f32 0.0, %v716
    %v718 = vpop.f32.mrf.mxu0
    %719 = vmatprep.mubr.f32.mxu0 0.0
    %720 = vmatmul.mubr.f32.gmra.mxu0 %v605
    %v721 = vpop.f32.mrf.mxu0
    %v722 = vadd.f32 0.0, %v721
    %v723 = vpop.f32.mrf.mxu0
    %724 = vmatprep.mubr.f32.mxu0 0.0
    %725 = vmatmul.mubr.f32.gmra.mxu0 %v606
    %v726 = vpop.f32.mrf.mxu0
    %v727 = vadd.f32 0.0, %v726
    %v728 = vpop.f32.mrf.mxu0
    %729 = vmatprep.mubr.f32.mxu0 0.0
    %730 = vmatmul.mubr.f32.gmra.mxu0 %v607
    %v731 = vpop.f32.mrf.mxu0
    %v732 = vadd.f32 0.0, %v731
    %v733 = vpop.f32.mrf.mxu0
    %734 = vmatprep.mubr.f32.mxu0 0.0
    %735 = vmatmul.mubr.f32.gmra.mxu0 %v608
    %v736 = vpop.f32.mrf.mxu0
    %v737 = vadd.f32 0.0, %v736
    %v738 = vpop.f32.mrf.mxu0
    %739 = vmatprep.mubr.f32.mxu0 0.0
    %740 = vmatmul.mubr.f32.gmra.mxu0 %v609
    %v741 = vpop.f32.mrf.mxu0
    %v742 = vadd.f32 0.0, %v741
    %v743 = vpop.f32.mrf.mxu0
    %744 = vmatprep.mubr.f32.mxu0 0.0
    %745 = vmatmul.mubr.f32.gmra.mxu0 %v610
    %v746 = vpop.f32.mrf.mxu0
    %v747 = vadd.f32 0.0, %v746
    %v748 = vpop.f32.mrf.mxu0
    %749 = vdwg.mxu0
    %750 = vmatprep.subr.mxu0 0.0
    %751 = vmatpush1.msra.mxu0 %v644
    %752 = vmatprep.subr.mxu0 0.0
    %753 = vmatpush1.msra.mxu0 %v643
    %754 = vmatprep.subr.mxu0 0.0
    %755 = vmatpush1.msra.mxu0 %v642
    %756 = vmatprep.subr.mxu0 0.0
    %757 = vmatpush1.msra.mxu0 %v641
    %758 = vmatprep.subr.mxu0 0.0
    %759 = vmatpush1.msra.mxu0 %v640
    %760 = vmatprep.subr.mxu0 0.0
    %761 = vmatpush1.msra.mxu0 %v639
    %762 = vmatprep.subr.mxu0 0.0
    %763 = vmatpush1.msra.mxu0 %v638
    %764 = vmatprep.subr.mxu0 0.0
    %765 = vmatpush1.msra.mxu0 %v637
    %766 = vmatprep.subr.mxu0 0.0
    %767 = vmatpush1.msra.mxu0 %v636
    %768 = vmatprep.subr.mxu0 0.0
    %769 = vmatpush1.msra.mxu0 %v635
    %770 = vmatprep.subr.mxu0 0.0
    %771 = vmatpush1.msra.mxu0 %v634
    %772 = vmatprep.subr.mxu0 0.0
    %773 = vmatpush1.msra.mxu0 %v633
    %774 = vmatprep.subr.mxu0 0.0
    %775 = vmatpush1.msra.mxu0 %v632
    %776 = vmatprep.subr.mxu0 0.0
    %777 = vmatpush1.msra.mxu0 %v631
    %778 = vmatprep.subr.mxu0 0.0
    %779 = vmatpush1.msra.mxu0 %v630
    %780 = vmatprep.subr.mxu0 0.0
    %781 = vmatpush1.msra.mxu0 %v629
    %782 = vmatprep.subr.mxu0 0.0
    %783 = vmatpush2.msra.mxu0 0.0
    %784 = vmatprep.subr.mxu0 0.0
    %785 = vmatpush2.msra.mxu0 0.0
    %786 = vmatprep.subr.mxu0 0.0
    %787 = vmatpush2.msra.mxu0 0.0
    %788 = vmatprep.subr.mxu0 0.0
    %789 = vmatpush2.msra.mxu0 0.0
    %790 = vmatprep.subr.mxu0 0.0
    %791 = vmatpush2.msra.mxu0 0.0
    %792 = vmatprep.subr.mxu0 0.0
    %793 = vmatpush2.msra.mxu0 0.0
    %794 = vmatprep.subr.mxu0 0.0
    %795 = vmatpush2.msra.mxu0 0.0
    %796 = vmatprep.subr.mxu0 0.0
    %797 = vmatpush2.msra.mxu0 0.0
    %798 = vmatprep.subr.mxu0 0.0
    %799 = vmatpush2.msra.mxu0 0.0
    %800 = vmatprep.subr.mxu0 0.0
    %801 = vmatpush2.msra.mxu0 0.0
    %802 = vmatprep.subr.mxu0 0.0
    %803 = vmatpush2.msra.mxu0 0.0
    %804 = vmatprep.subr.mxu0 0.0
    %805 = vmatpush2.msra.mxu0 0.0
    %806 = vmatprep.subr.mxu0 0.0
    %807 = vmatpush2.msra.mxu0 0.0
    %808 = vmatprep.subr.mxu0 0.0
    %809 = vmatpush2.msra.mxu0 0.0
    %810 = vmatprep.subr.mxu0 0.0
    %811 = vmatpush2.msra.mxu0 0.0
    %812 = vmatprep.subr.mxu0 0.0
    %813 = vmatpush2.msra.mxu0 0.0
    %814 = vmatprep.mubr.f32.mxu0 0.0
    %815 = vmatmul.mubr.f32.gmra.mxu0 %v603
    %v816 = vpop.f32.mrf.mxu0
    %v817 = vadd.f32 0.0, %v816
    %v818 = vpop.f32.mrf.mxu0
    %819 = vmatprep.mubr.f32.mxu0 0.0
    %820 = vmatmul.mubr.f32.gmra.mxu0 %v604
    %v821 = vpop.f32.mrf.mxu0
    %v822 = vadd.f32 0.0, %v821
    %v823 = vpop.f32.mrf.mxu0
    %824 = vmatprep.mubr.f32.mxu0 0.0
    %825 = vmatmul.mubr.f32.gmra.mxu0 %v605
    %v826 = vpop.f32.mrf.mxu0
    %v827 = vadd.f32 0.0, %v826
    %v828 = vpop.f32.mrf.mxu0
    %829 = vmatprep.mubr.f32.mxu0 0.0
    %830 = vmatmul.mubr.f32.gmra.mxu0 %v606
    %v831 = vpop.f32.mrf.mxu0
    %v832 = vadd.f32 0.0, %v831
    %v833 = vpop.f32.mrf.mxu0
    %834 = vmatprep.mubr.f32.mxu0 0.0
    %835 = vmatmul.mubr.f32.gmra.mxu0 %v607
    %v836 = vpop.f32.mrf.mxu0
    %v837 = vadd.f32 0.0, %v836
    %v838 = vpop.f32.mrf.mxu0
    %839 = vmatprep.mubr.f32.mxu0 0.0
    %840 = vmatmul.mubr.f32.gmra.mxu0 %v608
    %v841 = vpop.f32.mrf.mxu0
    %v842 = vadd.f32 0.0, %v841
    %v843 = vpop.f32.mrf.mxu0
    %844 = vmatprep.mubr.f32.mxu0 0.0
    %845 = vmatmul.mubr.f32.gmra.mxu0 %v609
    %v846 = vpop.f32.mrf.mxu0
    %v847 = vadd.f32 0.0, %v846
    %v848 = vpop.f32.mrf.mxu0
    %849 = vmatprep.mubr.f32.mxu0 0.0
    %850 = vmatmul.mubr.f32.gmra.mxu0 %v610
    %v851 = vpop.f32.mrf.mxu0
    %v852 = vadd.f32 0.0, %v851
    %v853 = vpop.f32.mrf.mxu0
    %854 = vdwg.mxu0
    %855 = vmatprep.subr.mxu0 0.0
    %856 = vmatpush1.msra.mxu0 0.0
    %857 = vmatprep.subr.mxu0 0.0
    %858 = vmatpush1.msra.mxu0 0.0
    %859 = vmatprep.subr.mxu0 0.0
    %860 = vmatpush1.msra.mxu0 0.0
    %861 = vmatprep.subr.mxu0 0.0
    %862 = vmatpush1.msra.mxu0 0.0
    %863 = vmatprep.subr.mxu0 0.0
    %864 = vmatpush1.msra.mxu0 0.0
    %865 = vmatprep.subr.mxu0 0.0
    %866 = vmatpush1.msra.mxu0 0.0
    %867 = vmatprep.subr.mxu0 0.0
    %868 = vmatpush1.msra.mxu0 0.0
    %869 = vmatprep.subr.mxu0 0.0
    %870 = vmatpush1.msra.mxu0 0.0
    %871 = vmatprep.subr.mxu0 0.0
    %872 = vmatpush1.msra.mxu0 %v747
    %873 = vmatprep.subr.mxu0 0.0
    %874 = vmatpush1.msra.mxu0 %v742
    %875 = vmatprep.subr.mxu0 0.0
    %876 = vmatpush1.msra.mxu0 %v737
    %877 = vmatprep.subr.mxu0 0.0
    %878 = vmatpush1.msra.mxu0 %v732
    %879 = vmatprep.subr.mxu0 0.0
    %880 = vmatpush1.msra.mxu0 %v727
    %881 = vmatprep.subr.mxu0 0.0
    %882 = vmatpush1.msra.mxu0 %v722
    %883 = vmatprep.subr.mxu0 0.0
    %884 = vmatpush1.msra.mxu0 %v717
    %885 = vmatprep.subr.mxu0 0.0
    %886 = vmatpush1.msra.mxu0 %v712
    %887 = vmatprep.subr.mxu0 0.0
    %888 = vmatpush2.msra.mxu0 0.0
    %889 = vmatprep.subr.mxu0 0.0
    %890 = vmatpush2.msra.mxu0 0.0
    %891 = vmatprep.subr.mxu0 0.0
    %892 = vmatpush2.msra.mxu0 0.0
    %893 = vmatprep.subr.mxu0 0.0
    %894 = vmatpush2.msra.mxu0 0.0
    %895 = vmatprep.subr.mxu0 0.0
    %896 = vmatpush2.msra.mxu0 0.0
    %897 = vmatprep.subr.mxu0 0.0
    %898 = vmatpush2.msra.mxu0 0.0
    %899 = vmatprep.subr.mxu0 0.0
    %900 = vmatpush2.msra.mxu0 0.0
    %901 = vmatprep.subr.mxu0 0.0
    %902 = vmatpush2.msra.mxu0 0.0
    %903 = vmatprep.subr.mxu0 0.0
    %904 = vmatpush2.msra.mxu0 0.0
    %905 = vmatprep.subr.mxu0 0.0
    %906 = vmatpush2.msra.mxu0 0.0
    %907 = vmatprep.subr.mxu0 0.0
    %908 = vmatpush2.msra.mxu0 0.0
    %909 = vmatprep.subr.mxu0 0.0
    %910 = vmatpush2.msra.mxu0 0.0
    %911 = vmatprep.subr.mxu0 0.0
    %912 = vmatpush2.msra.mxu0 0.0
    %913 = vmatprep.subr.mxu0 0.0
    %914 = vmatpush2.msra.mxu0 0.0
    %915 = vmatprep.subr.mxu0 0.0
    %916 = vmatpush2.msra.mxu0 0.0
    %917 = vmatprep.subr.mxu0 0.0
    %918 = vmatpush2.msra.mxu0 0.0
    %919 = vmatprep.mubr.f32.mxu0 0.0
    %920 = vmatmul.mubr.f32.gmra.mxu0 %v460
    %v921 = vpop.f32.mrf.mxu0
    %v922 = vadd.f32 %v817, %v921
    %v923 = vpop.f32.mrf.mxu0
    %924 = vmatprep.mubr.f32.mxu0 0.0
    %925 = vmatmul.mubr.f32.gmra.mxu0 %v463
    %v926 = vpop.f32.mrf.mxu0
    %v927 = vadd.f32 %v822, %v926
    %v928 = vpop.f32.mrf.mxu0
    %929 = vmatprep.mubr.f32.mxu0 0.0
    %930 = vmatmul.mubr.f32.gmra.mxu0 %v466
    %v931 = vpop.f32.mrf.mxu0
    %v932 = vadd.f32 %v827, %v931
    %v933 = vpop.f32.mrf.mxu0
    %934 = vmatprep.mubr.f32.mxu0 0.0
    %935 = vmatmul.mubr.f32.gmra.mxu0 %v469
    %v936 = vpop.f32.mrf.mxu0
    %v937 = vadd.f32 %v832, %v936
    %v938 = vpop.f32.mrf.mxu0
    %939 = vmatprep.mubr.f32.mxu0 0.0
    %940 = vmatmul.mubr.f32.gmra.mxu0 %v472
    %v941 = vpop.f32.mrf.mxu0
    %v942 = vadd.f32 %v837, %v941
    %v943 = vpop.f32.mrf.mxu0
    %944 = vmatprep.mubr.f32.mxu0 0.0
    %945 = vmatmul.mubr.f32.gmra.mxu0 %v475
    %v946 = vpop.f32.mrf.mxu0
    %v947 = vadd.f32 %v842, %v946
    %v948 = vpop.f32.mrf.mxu0
    %949 = vmatprep.mubr.f32.mxu0 0.0
    %950 = vmatmul.mubr.f32.gmra.mxu0 %v478
    %v951 = vpop.f32.mrf.mxu0
    %v952 = vadd.f32 %v847, %v951
    %v953 = vpop.f32.mrf.mxu0
    %954 = vmatprep.mubr.f32.mxu0 0.0
    %955 = vmatmul.mubr.f32.gmra.mxu0 %v481
    %v956 = vpop.f32.mrf.mxu0
    %v957 = vadd.f32 %v852, %v956
    %v958 = vpop.f32.mrf.mxu0
    %959 = vdwg.mxu0
    %s960 = scalar_lea.vmem %s5, 1
    %v961 = vld [vmem:[%s960] sm:$0x1]
    %v963 = vlaneseq
    %v964 = vshrl.u32 %v963, 7
    %v965 = vsub.s32 0, %v964
    %v966 = vrot.slane %v961, %v965
    %v968 = vadd.f32 %v922, %v966
    %v969 = vadd.f32 %v927, %v966
    %v970 = vadd.f32 %v932, %v966
    %v971 = vadd.f32 %v937, %v966
    %v972 = vadd.f32 %v942, %v966
    %v973 = vadd.f32 %v947, %v966
    %v974 = vadd.f32 %v952, %v966
    %v975 = vadd.f32 %v957, %v966
    %v976 = vmax.f32 %v968, 0.0
    %v977 = vmax.f32 %v969, 0.0
    %v978 = vmax.f32 %v970, 0.0
    %v979 = vmax.f32 %v971, 0.0
    %v980 = vmax.f32 %v972, 0.0
    %v981 = vmax.f32 %v973, 0.0
    %v982 = vmax.f32 %v974, 0.0
    %v983 = vmax.f32 %v975, 0.0
    %s984 = scalar_lea.vmem [#allocation8], 256
    %v985 = vld [vmem:[%s984] sm:$0xff]
    %v986 = vld [vmem:[%s984 + $0x8] sm:$0xff]
    %v987 = vld [vmem:[%s984 + $0x10] sm:$0xff]
    %v988 = vld [vmem:[%s984 + $0x18] sm:$0xff]
    %v989 = vld [vmem:[%s984 + $0x20] sm:$0xff]
    %v990 = vld [vmem:[%s984 + $0x28] sm:$0xff]
    %v991 = vld [vmem:[%s984 + $0x30] sm:$0xff]
    %v992 = vld [vmem:[%s984 + $0x38] sm:$0xff]
    %v993 = vld [vmem:[%s984 + $0x40] sm:$0xff]
    %v994 = vld [vmem:[%s984 + $0x48] sm:$0xff]
    %v995 = vld [vmem:[%s984 + $0x50] sm:$0xff]
    %v996 = vld [vmem:[%s984 + $0x58] sm:$0xff]
    %v997 = vld [vmem:[%s984 + $0x60] sm:$0xff]
    %v998 = vld [vmem:[%s984 + $0x68] sm:$0xff]
    %v999 = vld [vmem:[%s984 + $0x70] sm:$0xff]
    %v1000 = vld [vmem:[%s984 + $0x78] sm:$0xff]
    %s1001 = scalar_lea.vmem [#allocation10], 256
    %v1002 = vld [vmem:[%s1001] sm:$0xff]
    %v1003 = vld [vmem:[%s1001 + $0x8] sm:$0xff]
    %v1004 = vld [vmem:[%s1001 + $0x10] sm:$0xff]
    %v1005 = vld [vmem:[%s1001 + $0x18] sm:$0xff]
    %v1006 = vld [vmem:[%s1001 + $0x20] sm:$0xff]
    %v1007 = vld [vmem:[%s1001 + $0x28] sm:$0xff]
    %v1008 = vld [vmem:[%s1001 + $0x30] sm:$0xff]
    %v1009 = vld [vmem:[%s1001 + $0x38] sm:$0xff]
    %v1010 = vld [vmem:[%s1001 + $0x40] sm:$0xff]
    %v1011 = vld [vmem:[%s1001 + $0x48] sm:$0xff]
    %v1012 = vld [vmem:[%s1001 + $0x50] sm:$0xff]
    %v1013 = vld [vmem:[%s1001 + $0x58] sm:$0xff]
    %v1014 = vld [vmem:[%s1001 + $0x60] sm:$0xff]
    %v1015 = vld [vmem:[%s1001 + $0x68] sm:$0xff]
    %v1016 = vld [vmem:[%s1001 + $0x70] sm:$0xff]
    %v1017 = vld [vmem:[%s1001 + $0x78] sm:$0xff]
    %1018 = vmatprep.subr.mxu0 0.0
    %1019 = vmatpush1.msra.mxu0 %v1000
    %1020 = vmatprep.subr.mxu0 0.0
    %1021 = vmatpush1.msra.mxu0 %v999
    %1022 = vmatprep.subr.mxu0 0.0
    %1023 = vmatpush1.msra.mxu0 %v998
    %1024 = vmatprep.subr.mxu0 0.0
    %1025 = vmatpush1.msra.mxu0 %v997
    %1026 = vmatprep.subr.mxu0 0.0
    %1027 = vmatpush1.msra.mxu0 %v996
    %1028 = vmatprep.subr.mxu0 0.0
    %1029 = vmatpush1.msra.mxu0 %v995
    %1030 = vmatprep.subr.mxu0 0.0
    %1031 = vmatpush1.msra.mxu0 %v994
    %1032 = vmatprep.subr.mxu0 0.0
    %1033 = vmatpush1.msra.mxu0 %v993
    %1034 = vmatprep.subr.mxu0 0.0
    %1035 = vmatpush1.msra.mxu0 %v992
    %1036 = vmatprep.subr.mxu0 0.0
    %1037 = vmatpush1.msra.mxu0 %v991
    %1038 = vmatprep.subr.mxu0 0.0
    %1039 = vmatpush1.msra.mxu0 %v990
    %1040 = vmatprep.subr.mxu0 0.0
    %1041 = vmatpush1.msra.mxu0 %v989
    %1042 = vmatprep.subr.mxu0 0.0
    %1043 = vmatpush1.msra.mxu0 %v988
    %1044 = vmatprep.subr.mxu0 0.0
    %1045 = vmatpush1.msra.mxu0 %v987
    %1046 = vmatprep.subr.mxu0 0.0
    %1047 = vmatpush1.msra.mxu0 %v986
    %1048 = vmatprep.subr.mxu0 0.0
    %1049 = vmatpush1.msra.mxu0 %v985
    %1050 = vmatprep.subr.mxu0 0.0
    %1051 = vmatpush2.msra.mxu0 0.0
    %1052 = vmatprep.subr.mxu0 0.0
    %1053 = vmatpush2.msra.mxu0 0.0
    %1054 = vmatprep.subr.mxu0 0.0
    %1055 = vmatpush2.msra.mxu0 0.0
    %1056 = vmatprep.subr.mxu0 0.0
    %1057 = vmatpush2.msra.mxu0 0.0
    %1058 = vmatprep.subr.mxu0 0.0
    %1059 = vmatpush2.msra.mxu0 0.0
    %1060 = vmatprep.subr.mxu0 0.0
    %1061 = vmatpush2.msra.mxu0 0.0
    %1062 = vmatprep.subr.mxu0 0.0
    %1063 = vmatpush2.msra.mxu0 0.0
    %1064 = vmatprep.subr.mxu0 0.0
    %1065 = vmatpush2.msra.mxu0 0.0
    %1066 = vmatprep.subr.mxu0 0.0
    %1067 = vmatpush2.msra.mxu0 0.0
    %1068 = vmatprep.subr.mxu0 0.0
    %1069 = vmatpush2.msra.mxu0 0.0
    %1070 = vmatprep.subr.mxu0 0.0
    %1071 = vmatpush2.msra.mxu0 0.0
    %1072 = vmatprep.subr.mxu0 0.0
    %1073 = vmatpush2.msra.mxu0 0.0
    %1074 = vmatprep.subr.mxu0 0.0
    %1075 = vmatpush2.msra.mxu0 0.0
    %1076 = vmatprep.subr.mxu0 0.0
    %1077 = vmatpush2.msra.mxu0 0.0
    %1078 = vmatprep.subr.mxu0 0.0
    %1079 = vmatpush2.msra.mxu0 0.0
    %1080 = vmatprep.subr.mxu0 0.0
    %1081 = vmatpush2.msra.mxu0 0.0
    %1082 = vmatprep.mubr.f32.mxu0 0.0
    %1083 = vmatmul.mubr.f32.gmra.mxu0 %v976
    %v1084 = vpop.f32.mrf.mxu0
    %v1085 = vadd.f32 0.0, %v1084
    %v1086 = vpop.f32.mrf.mxu0
    %1087 = vmatprep.mubr.f32.mxu0 0.0
    %1088 = vmatmul.mubr.f32.gmra.mxu0 %v977
    %v1089 = vpop.f32.mrf.mxu0
    %v1090 = vadd.f32 0.0, %v1089
    %v1091 = vpop.f32.mrf.mxu0
    %1092 = vmatprep.mubr.f32.mxu0 0.0
    %1093 = vmatmul.mubr.f32.gmra.mxu0 %v978
    %v1094 = vpop.f32.mrf.mxu0
    %v1095 = vadd.f32 0.0, %v1094
    %v1096 = vpop.f32.mrf.mxu0
    %1097 = vmatprep.mubr.f32.mxu0 0.0
    %1098 = vmatmul.mubr.f32.gmra.mxu0 %v979
    %v1099 = vpop.f32.mrf.mxu0
    %v1100 = vadd.f32 0.0, %v1099
    %v1101 = vpop.f32.mrf.mxu0
    %1102 = vmatprep.mubr.f32.mxu0 0.0
    %1103 = vmatmul.mubr.f32.gmra.mxu0 %v980
    %v1104 = vpop.f32.mrf.mxu0
    %v1105 = vadd.f32 0.0, %v1104
    %v1106 = vpop.f32.mrf.mxu0
    %1107 = vmatprep.mubr.f32.mxu0 0.0
    %1108 = vmatmul.mubr.f32.gmra.mxu0 %v981
    %v1109 = vpop.f32.mrf.mxu0
    %v1110 = vadd.f32 0.0, %v1109
    %v1111 = vpop.f32.mrf.mxu0
    %1112 = vmatprep.mubr.f32.mxu0 0.0
    %1113 = vmatmul.mubr.f32.gmra.mxu0 %v982
    %v1114 = vpop.f32.mrf.mxu0
    %v1115 = vadd.f32 0.0, %v1114
    %v1116 = vpop.f32.mrf.mxu0
    %1117 = vmatprep.mubr.f32.mxu0 0.0
    %1118 = vmatmul.mubr.f32.gmra.mxu0 %v983
    %v1119 = vpop.f32.mrf.mxu0
    %v1120 = vadd.f32 0.0, %v1119
    %v1121 = vpop.f32.mrf.mxu0
    %1122 = vdwg.mxu0
    %1123 = vmatprep.subr.mxu0 0.0
    %1124 = vmatpush1.msra.mxu0 %v1017
    %1125 = vmatprep.subr.mxu0 0.0
    %1126 = vmatpush1.msra.mxu0 %v1016
    %1127 = vmatprep.subr.mxu0 0.0
    %1128 = vmatpush1.msra.mxu0 %v1015
    %1129 = vmatprep.subr.mxu0 0.0
    %1130 = vmatpush1.msra.mxu0 %v1014
    %1131 = vmatprep.subr.mxu0 0.0
    %1132 = vmatpush1.msra.mxu0 %v1013
    %1133 = vmatprep.subr.mxu0 0.0
    %1134 = vmatpush1.msra.mxu0 %v1012
    %1135 = vmatprep.subr.mxu0 0.0
    %1136 = vmatpush1.msra.mxu0 %v1011
    %1137 = vmatprep.subr.mxu0 0.0
    %1138 = vmatpush1.msra.mxu0 %v1010
    %1139 = vmatprep.subr.mxu0 0.0
    %1140 = vmatpush1.msra.mxu0 %v1009
    %1141 = vmatprep.subr.mxu0 0.0
    %1142 = vmatpush1.msra.mxu0 %v1008
    %1143 = vmatprep.subr.mxu0 0.0
    %1144 = vmatpush1.msra.mxu0 %v1007
    %1145 = vmatprep.subr.mxu0 0.0
    %1146 = vmatpush1.msra.mxu0 %v1006
    %1147 = vmatprep.subr.mxu0 0.0
    %1148 = vmatpush1.msra.mxu0 %v1005
    %1149 = vmatprep.subr.mxu0 0.0
    %1150 = vmatpush1.msra.mxu0 %v1004
    %1151 = vmatprep.subr.mxu0 0.0
    %1152 = vmatpush1.msra.mxu0 %v1003
    %1153 = vmatprep.subr.mxu0 0.0
    %1154 = vmatpush1.msra.mxu0 %v1002
    %1155 = vmatprep.subr.mxu0 0.0
    %1156 = vmatpush2.msra.mxu0 0.0
    %1157 = vmatprep.subr.mxu0 0.0
    %1158 = vmatpush2.msra.mxu0 0.0
    %1159 = vmatprep.subr.mxu0 0.0
    %1160 = vmatpush2.msra.mxu0 0.0
    %1161 = vmatprep.subr.mxu0 0.0
    %1162 = vmatpush2.msra.mxu0 0.0
    %1163 = vmatprep.subr.mxu0 0.0
    %1164 = vmatpush2.msra.mxu0 0.0
    %1165 = vmatprep.subr.mxu0 0.0
    %1166 = vmatpush2.msra.mxu0 0.0
    %1167 = vmatprep.subr.mxu0 0.0
    %1168 = vmatpush2.msra.mxu0 0.0
    %1169 = vmatprep.subr.mxu0 0.0
    %1170 = vmatpush2.msra.mxu0 0.0
    %1171 = vmatprep.subr.mxu0 0.0
    %1172 = vmatpush2.msra.mxu0 0.0
    %1173 = vmatprep.subr.mxu0 0.0
    %1174 = vmatpush2.msra.mxu0 0.0
    %1175 = vmatprep.subr.mxu0 0.0
    %1176 = vmatpush2.msra.mxu0 0.0
    %1177 = vmatprep.subr.mxu0 0.0
    %1178 = vmatpush2.msra.mxu0 0.0
    %1179 = vmatprep.subr.mxu0 0.0
    %1180 = vmatpush2.msra.mxu0 0.0
    %1181 = vmatprep.subr.mxu0 0.0
    %1182 = vmatpush2.msra.mxu0 0.0
    %1183 = vmatprep.subr.mxu0 0.0
    %1184 = vmatpush2.msra.mxu0 0.0
    %1185 = vmatprep.subr.mxu0 0.0
    %1186 = vmatpush2.msra.mxu0 0.0
    %1187 = vmatprep.mubr.f32.mxu0 0.0
    %1188 = vmatmul.mubr.f32.gmra.mxu0 %v976
    %v1189 = vpop.f32.mrf.mxu0
    %v1190 = vadd.f32 0.0, %v1189
    %v1191 = vpop.f32.mrf.mxu0
    %1192 = vmatprep.mubr.f32.mxu0 0.0
    %1193 = vmatmul.mubr.f32.gmra.mxu0 %v977
    %v1194 = vpop.f32.mrf.mxu0
    %v1195 = vadd.f32 0.0, %v1194
    %v1196 = vpop.f32.mrf.mxu0
    %1197 = vmatprep.mubr.f32.mxu0 0.0
    %1198 = vmatmul.mubr.f32.gmra.mxu0 %v978
    %v1199 = vpop.f32.mrf.mxu0
    %v1200 = vadd.f32 0.0, %v1199
    %v1201 = vpop.f32.mrf.mxu0
    %1202 = vmatprep.mubr.f32.mxu0 0.0
    %1203 = vmatmul.mubr.f32.gmra.mxu0 %v979
    %v1204 = vpop.f32.mrf.mxu0
    %v1205 = vadd.f32 0.0, %v1204
    %v1206 = vpop.f32.mrf.mxu0
    %1207 = vmatprep.mubr.f32.mxu0 0.0
    %1208 = vmatmul.mubr.f32.gmra.mxu0 %v980
    %v1209 = vpop.f32.mrf.mxu0
    %v1210 = vadd.f32 0.0, %v1209
    %v1211 = vpop.f32.mrf.mxu0
    %1212 = vmatprep.mubr.f32.mxu0 0.0
    %1213 = vmatmul.mubr.f32.gmra.mxu0 %v981
    %v1214 = vpop.f32.mrf.mxu0
    %v1215 = vadd.f32 0.0, %v1214
    %v1216 = vpop.f32.mrf.mxu0
    %1217 = vmatprep.mubr.f32.mxu0 0.0
    %1218 = vmatmul.mubr.f32.gmra.mxu0 %v982
    %v1219 = vpop.f32.mrf.mxu0
    %v1220 = vadd.f32 0.0, %v1219
    %v1221 = vpop.f32.mrf.mxu0
    %1222 = vmatprep.mubr.f32.mxu0 0.0
    %1223 = vmatmul.mubr.f32.gmra.mxu0 %v983
    %v1224 = vpop.f32.mrf.mxu0
    %v1225 = vadd.f32 0.0, %v1224
    %v1226 = vpop.f32.mrf.mxu0
    %1227 = vdwg.mxu0
    %1228 = vmatprep.subr.mxu0 0.0
    %1229 = vmatpush1.msra.mxu0 0.0
    %1230 = vmatprep.subr.mxu0 0.0
    %1231 = vmatpush1.msra.mxu0 0.0
    %1232 = vmatprep.subr.mxu0 0.0
    %1233 = vmatpush1.msra.mxu0 0.0
    %1234 = vmatprep.subr.mxu0 0.0
    %1235 = vmatpush1.msra.mxu0 0.0
    %1236 = vmatprep.subr.mxu0 0.0
    %1237 = vmatpush1.msra.mxu0 0.0
    %1238 = vmatprep.subr.mxu0 0.0
    %1239 = vmatpush1.msra.mxu0 0.0
    %1240 = vmatprep.subr.mxu0 0.0
    %1241 = vmatpush1.msra.mxu0 0.0
    %1242 = vmatprep.subr.mxu0 0.0
    %1243 = vmatpush1.msra.mxu0 0.0
    %1244 = vmatprep.subr.mxu0 0.0
    %1245 = vmatpush1.msra.mxu0 %v1120
    %1246 = vmatprep.subr.mxu0 0.0
    %1247 = vmatpush1.msra.mxu0 %v1115
    %1248 = vmatprep.subr.mxu0 0.0
    %1249 = vmatpush1.msra.mxu0 %v1110
    %1250 = vmatprep.subr.mxu0 0.0
    %1251 = vmatpush1.msra.mxu0 %v1105
    %1252 = vmatprep.subr.mxu0 0.0
    %1253 = vmatpush1.msra.mxu0 %v1100
    %1254 = vmatprep.subr.mxu0 0.0
    %1255 = vmatpush1.msra.mxu0 %v1095
    %1256 = vmatprep.subr.mxu0 0.0
    %1257 = vmatpush1.msra.mxu0 %v1090
    %1258 = vmatprep.subr.mxu0 0.0
    %1259 = vmatpush1.msra.mxu0 %v1085
    %1260 = vmatprep.subr.mxu0 0.0
    %1261 = vmatpush2.msra.mxu0 0.0
    %1262 = vmatprep.subr.mxu0 0.0
    %1263 = vmatpush2.msra.mxu0 0.0
    %1264 = vmatprep.subr.mxu0 0.0
    %1265 = vmatpush2.msra.mxu0 0.0
    %1266 = vmatprep.subr.mxu0 0.0
    %1267 = vmatpush2.msra.mxu0 0.0
    %1268 = vmatprep.subr.mxu0 0.0
    %1269 = vmatpush2.msra.mxu0 0.0
    %1270 = vmatprep.subr.mxu0 0.0
    %1271 = vmatpush2.msra.mxu0 0.0
    %1272 = vmatprep.subr.mxu0 0.0
    %1273 = vmatpush2.msra.mxu0 0.0
    %1274 = vmatprep.subr.mxu0 0.0
    %1275 = vmatpush2.msra.mxu0 0.0
    %1276 = vmatprep.subr.mxu0 0.0
    %1277 = vmatpush2.msra.mxu0 0.0
    %1278 = vmatprep.subr.mxu0 0.0
    %1279 = vmatpush2.msra.mxu0 0.0
    %1280 = vmatprep.subr.mxu0 0.0
    %1281 = vmatpush2.msra.mxu0 0.0
    %1282 = vmatprep.subr.mxu0 0.0
    %1283 = vmatpush2.msra.mxu0 0.0
    %1284 = vmatprep.subr.mxu0 0.0
    %1285 = vmatpush2.msra.mxu0 0.0
    %1286 = vmatprep.subr.mxu0 0.0
    %1287 = vmatpush2.msra.mxu0 0.0
    %1288 = vmatprep.subr.mxu0 0.0
    %1289 = vmatpush2.msra.mxu0 0.0
    %1290 = vmatprep.subr.mxu0 0.0
    %1291 = vmatpush2.msra.mxu0 0.0
    %1292 = vmatprep.mubr.f32.mxu0 0.0
    %1293 = vmatmul.mubr.f32.gmra.mxu0 %v460
    %v1294 = vpop.f32.mrf.mxu0
    %v1295 = vadd.f32 %v1190, %v1294
    %v1296 = vpop.f32.mrf.mxu0
    %1297 = vmatprep.mubr.f32.mxu0 0.0
    %1298 = vmatmul.mubr.f32.gmra.mxu0 %v463
    %v1299 = vpop.f32.mrf.mxu0
    %v1300 = vadd.f32 %v1195, %v1299
    %v1301 = vpop.f32.mrf.mxu0
    %1302 = vmatprep.mubr.f32.mxu0 0.0
    %1303 = vmatmul.mubr.f32.gmra.mxu0 %v466
    %v1304 = vpop.f32.mrf.mxu0
    %v1305 = vadd.f32 %v1200, %v1304
    %v1306 = vpop.f32.mrf.mxu0
    %1307 = vmatprep.mubr.f32.mxu0 0.0
    %1308 = vmatmul.mubr.f32.gmra.mxu0 %v469
    %v1309 = vpop.f32.mrf.mxu0
    %v1310 = vadd.f32 %v1205, %v1309
    %v1311 = vpop.f32.mrf.mxu0
    %1312 = vmatprep.mubr.f32.mxu0 0.0
    %1313 = vmatmul.mubr.f32.gmra.mxu0 %v472
    %v1314 = vpop.f32.mrf.mxu0
    %v1315 = vadd.f32 %v1210, %v1314
    %v1316 = vpop.f32.mrf.mxu0
    %1317 = vmatprep.mubr.f32.mxu0 0.0
    %1318 = vmatmul.mubr.f32.gmra.mxu0 %v475
    %v1319 = vpop.f32.mrf.mxu0
    %v1320 = vadd.f32 %v1215, %v1319
    %v1321 = vpop.f32.mrf.mxu0
    %1322 = vmatprep.mubr.f32.mxu0 0.0
    %1323 = vmatmul.mubr.f32.gmra.mxu0 %v478
    %v1324 = vpop.f32.mrf.mxu0
    %v1325 = vadd.f32 %v1220, %v1324
    %v1326 = vpop.f32.mrf.mxu0
    %1327 = vmatprep.mubr.f32.mxu0 0.0
    %1328 = vmatmul.mubr.f32.gmra.mxu0 %v481
    %v1329 = vpop.f32.mrf.mxu0
    %v1330 = vadd.f32 %v1225, %v1329
    %v1331 = vpop.f32.mrf.mxu0
    %1332 = vdwg.mxu0
    %s1333 = scalar_lea.vmem %s5, 2
    %v1334 = vld [vmem:[%s1333] sm:$0x1]
    %v1336 = vlaneseq
    %v1337 = vshrl.u32 %v1336, 7
    %v1338 = vsub.s32 0, %v1337
    %v1339 = vrot.slane %v1334, %v1338
    %v1341 = vadd.f32 %v1295, %v1339
    %v1342 = vadd.f32 %v1300, %v1339
    %v1343 = vadd.f32 %v1305, %v1339
    %v1344 = vadd.f32 %v1310, %v1339
    %v1345 = vadd.f32 %v1315, %v1339
    %v1346 = vadd.f32 %v1320, %v1339
    %v1347 = vadd.f32 %v1325, %v1339
    %v1348 = vadd.f32 %v1330, %v1339
    %v1349 = vmax.f32 %v1341, 0.0
    %v1350 = vmax.f32 %v1342, 0.0
    %v1351 = vmax.f32 %v1343, 0.0
    %v1352 = vmax.f32 %v1344, 0.0
    %v1353 = vmax.f32 %v1345, 0.0
    %v1354 = vmax.f32 %v1346, 0.0
    %v1355 = vmax.f32 %v1347, 0.0
    %v1356 = vmax.f32 %v1348, 0.0
    %v1357 = vld [vmem:[#allocation7] sm:$0xff]
    %v1359 = vsel %vm458, %v1357, 0
    %1361 = vmatprep.subr.mxu0 0.0
    %1362 = vmatpush1.msra.mxu0 0.0
    %1363 = vmatprep.subr.mxu0 0.0
    %1364 = vmatpush1.msra.mxu0 0.0
    %1365 = vmatprep.subr.mxu0 0.0
    %1366 = vmatpush1.msra.mxu0 0.0
    %1367 = vmatprep.subr.mxu0 0.0
    %1368 = vmatpush1.msra.mxu0 0.0
    %1369 = vmatprep.subr.mxu0 0.0
    %1370 = vmatpush1.msra.mxu0 0.0
    %1371 = vmatprep.subr.mxu0 0.0
    %1372 = vmatpush1.msra.mxu0 0.0
    %1373 = vmatprep.subr.mxu0 0.0
    %1374 = vmatpush1.msra.mxu0 0.0
    %1375 = vmatprep.subr.mxu0 0.0
    %1376 = vmatpush1.msra.mxu0 0.0
    %1377 = vmatprep.subr.mxu0 0.0
    %1378 = vmatpush1.msra.mxu0 %v1356
    %1379 = vmatprep.subr.mxu0 0.0
    %1380 = vmatpush1.msra.mxu0 %v1355
    %1381 = vmatprep.subr.mxu0 0.0
    %1382 = vmatpush1.msra.mxu0 %v1354
    %1383 = vmatprep.subr.mxu0 0.0
    %1384 = vmatpush1.msra.mxu0 %v1353
    %1385 = vmatprep.subr.mxu0 0.0
    %1386 = vmatpush1.msra.mxu0 %v1352
    %1387 = vmatprep.subr.mxu0 0.0
    %1388 = vmatpush1.msra.mxu0 %v1351
    %1389 = vmatprep.subr.mxu0 0.0
    %1390 = vmatpush1.msra.mxu0 %v1350
    %1391 = vmatprep.subr.mxu0 0.0
    %1392 = vmatpush1.msra.mxu0 %v1349
    %1393 = vmatprep.subr.mxu0 0.0
    %1394 = vmatpush2.msra.mxu0 0.0
    %1395 = vmatprep.subr.mxu0 0.0
    %1396 = vmatpush2.msra.mxu0 0.0
    %1397 = vmatprep.subr.mxu0 0.0
    %1398 = vmatpush2.msra.mxu0 0.0
    %1399 = vmatprep.subr.mxu0 0.0
    %1400 = vmatpush2.msra.mxu0 0.0
    %1401 = vmatprep.subr.mxu0 0.0
    %1402 = vmatpush2.msra.mxu0 0.0
    %1403 = vmatprep.subr.mxu0 0.0
    %1404 = vmatpush2.msra.mxu0 0.0
    %1405 = vmatprep.subr.mxu0 0.0
    %1406 = vmatpush2.msra.mxu0 0.0
    %1407 = vmatprep.subr.mxu0 0.0
    %1408 = vmatpush2.msra.mxu0 0.0
    %1409 = vmatprep.subr.mxu0 0.0
    %1410 = vmatpush2.msra.mxu0 0.0
    %1411 = vmatprep.subr.mxu0 0.0
    %1412 = vmatpush2.msra.mxu0 0.0
    %1413 = vmatprep.subr.mxu0 0.0
    %1414 = vmatpush2.msra.mxu0 0.0
    %1415 = vmatprep.subr.mxu0 0.0
    %1416 = vmatpush2.msra.mxu0 0.0
    %1417 = vmatprep.subr.mxu0 0.0
    %1418 = vmatpush2.msra.mxu0 0.0
    %1419 = vmatprep.subr.mxu0 0.0
    %1420 = vmatpush2.msra.mxu0 0.0
    %1421 = vmatprep.subr.mxu0 0.0
    %1422 = vmatpush2.msra.mxu0 0.0
    %1423 = vmatprep.subr.mxu0 0.0
    %1424 = vmatpush2.msra.mxu0 0.0
    %1425 = vmatprep.mubr.f32.mxu0 0.0
    %1426 = vmatmul.mubr.f32.gmra.mxu0 %v1359
    %v1427 = vpop.f32.mrf.mxu0
    %v1428 = vadd.f32 0.0, %v1427
    %v1429 = vpop.f32.mrf.mxu0
    %1430 = vdwg.mxu0
    %v1431 = vld [vmem:[#allocation11] sm:$0xff]
    %v1432 = vld [vmem:[#allocation11 + $0x8] sm:$0xff]
    %v1433 = vld [vmem:[#allocation11 + $0x10] sm:$0xff]
    %v1434 = vld [vmem:[#allocation11 + $0x18] sm:$0xff]
    %v1435 = vld [vmem:[#allocation11 + $0x20] sm:$0xff]
    %v1436 = vld [vmem:[#allocation11 + $0x28] sm:$0xff]
    %v1437 = vld [vmem:[#allocation11 + $0x30] sm:$0xff]
    %v1438 = vld [vmem:[#allocation11 + $0x38] sm:$0xff]
    %v1439 = vld [vmem:[#allocation11 + $0x40] sm:$0xff]
    %v1440 = vld [vmem:[#allocation11 + $0x48] sm:$0xff]
    %v1441 = vld [vmem:[#allocation11 + $0x50] sm:$0xff]
    %v1442 = vld [vmem:[#allocation11 + $0x58] sm:$0xff]
    %v1443 = vld [vmem:[#allocation11 + $0x60] sm:$0xff]
    %v1444 = vld [vmem:[#allocation11 + $0x68] sm:$0xff]
    %v1445 = vld [vmem:[#allocation11 + $0x70] sm:$0xff]
    %v1446 = vld [vmem:[#allocation11 + $0x78] sm:$0xff]
    %v1447 = vld [vmem:[%s7] sm:$0x1]
    %v1449 = vlaneseq
    %v1450 = vshrl.u32 %v1449, 7
    %v1451 = vsub.s32 0, %v1450
    %v1452 = vrot.slane %v1447, %v1451
    %1454 = vmatprep.subr.mxu0 0.0
    %1455 = vmatpush1.msra.mxu0 %v1446
    %1456 = vmatprep.subr.mxu0 0.0
    %1457 = vmatpush1.msra.mxu0 %v1445
    %1458 = vmatprep.subr.mxu0 0.0
    %1459 = vmatpush1.msra.mxu0 %v1444
    %1460 = vmatprep.subr.mxu0 0.0
    %1461 = vmatpush1.msra.mxu0 %v1443
    %1462 = vmatprep.subr.mxu0 0.0
    %1463 = vmatpush1.msra.mxu0 %v1442
    %1464 = vmatprep.subr.mxu0 0.0
    %1465 = vmatpush1.msra.mxu0 %v1441
    %1466 = vmatprep.subr.mxu0 0.0
    %1467 = vmatpush1.msra.mxu0 %v1440
    %1468 = vmatprep.subr.mxu0 0.0
    %1469 = vmatpush1.msra.mxu0 %v1439
    %1470 = vmatprep.subr.mxu0 0.0
    %1471 = vmatpush1.msra.mxu0 %v1438
    %1472 = vmatprep.subr.mxu0 0.0
    %1473 = vmatpush1.msra.mxu0 %v1437
    %1474 = vmatprep.subr.mxu0 0.0
    %1475 = vmatpush1.msra.mxu0 %v1436
    %1476 = vmatprep.subr.mxu0 0.0
    %1477 = vmatpush1.msra.mxu0 %v1435
    %1478 = vmatprep.subr.mxu0 0.0
    %1479 = vmatpush1.msra.mxu0 %v1434
    %1480 = vmatprep.subr.mxu0 0.0
    %1481 = vmatpush1.msra.mxu0 %v1433
    %1482 = vmatprep.subr.mxu0 0.0
    %1483 = vmatpush1.msra.mxu0 %v1432
    %1484 = vmatprep.subr.mxu0 0.0
    %1485 = vmatpush1.msra.mxu0 %v1431
    %1486 = vmatprep.subr.mxu0 0.0
    %1487 = vmatpush2.msra.mxu0 0.0
    %1488 = vmatprep.subr.mxu0 0.0
    %1489 = vmatpush2.msra.mxu0 0.0
    %1490 = vmatprep.subr.mxu0 0.0
    %1491 = vmatpush2.msra.mxu0 0.0
    %1492 = vmatprep.subr.mxu0 0.0
    %1493 = vmatpush2.msra.mxu0 0.0
    %1494 = vmatprep.subr.mxu0 0.0
    %1495 = vmatpush2.msra.mxu0 0.0
    %1496 = vmatprep.subr.mxu0 0.0
    %1497 = vmatpush2.msra.mxu0 0.0
    %1498 = vmatprep.subr.mxu0 0.0
    %1499 = vmatpush2.msra.mxu0 0.0
    %1500 = vmatprep.subr.mxu0 0.0
    %1501 = vmatpush2.msra.mxu0 0.0
    %1502 = vmatprep.subr.mxu0 0.0
    %1503 = vmatpush2.msra.mxu0 0.0
    %1504 = vmatprep.subr.mxu0 0.0
    %1505 = vmatpush2.msra.mxu0 0.0
    %1506 = vmatprep.subr.mxu0 0.0
    %1507 = vmatpush2.msra.mxu0 0.0
    %1508 = vmatprep.subr.mxu0 0.0
    %1509 = vmatpush2.msra.mxu0 0.0
    %1510 = vmatprep.subr.mxu0 0.0
    %1511 = vmatpush2.msra.mxu0 0.0
    %1512 = vmatprep.subr.mxu0 0.0
    %1513 = vmatpush2.msra.mxu0 0.0
    %1514 = vmatprep.subr.mxu0 0.0
    %1515 = vmatpush2.msra.mxu0 0.0
    %1516 = vmatprep.subr.mxu0 0.0
    %1517 = vmatpush2.msra.mxu0 0.0
    %1518 = vmatprep.mubr.f32.mxu0 0.0
    %1519 = vmatmul.mubr.f32.gmra.mxu0 %v1428
    %v1520 = vpop.f32.mrf.mxu0
    %v1521 = vadd.f32 %v1452, %v1520
    %v1522 = vpop.f32.mrf.mxu0
    %1523 = vdwg.mxu0
    %v1524 = vmax.f32 %v1521, 0.0
    %v1525 = vld [vmem:[#allocation13] sm:$0xff]
    %v1526 = vld [vmem:[#allocation13 + $0x8] sm:$0xff]
    %v1527 = vld [vmem:[#allocation13 + $0x10] sm:$0xff]
    %v1528 = vld [vmem:[#allocation13 + $0x18] sm:$0xff]
    %v1529 = vld [vmem:[#allocation13 + $0x20] sm:$0xff]
    %v1530 = vld [vmem:[#allocation13 + $0x28] sm:$0xff]
    %v1531 = vld [vmem:[#allocation13 + $0x30] sm:$0xff]
    %v1532 = vld [vmem:[#allocation13 + $0x38] sm:$0xff]
    %v1533 = vld [vmem:[#allocation13 + $0x40] sm:$0xff]
    %v1534 = vld [vmem:[#allocation13 + $0x48] sm:$0xff]
    %v1535 = vld [vmem:[#allocation13 + $0x50] sm:$0xff]
    %v1536 = vld [vmem:[#allocation13 + $0x58] sm:$0xff]
    %v1537 = vld [vmem:[#allocation13 + $0x60] sm:$0xff]
    %v1538 = vld [vmem:[#allocation13 + $0x68] sm:$0xff]
    %v1539 = vld [vmem:[#allocation13 + $0x70] sm:$0xff]
    %v1540 = vld [vmem:[#allocation13 + $0x78] sm:$0xff]
    %1541 = vmatprep.subr.mxu0 0.0
    %1542 = vmatpush1.msra.mxu0 %v1540
    %1543 = vmatprep.subr.mxu0 0.0
    %1544 = vmatpush1.msra.mxu0 %v1539
    %1545 = vmatprep.subr.mxu0 0.0
    %1546 = vmatpush1.msra.mxu0 %v1538
    %1547 = vmatprep.subr.mxu0 0.0
    %1548 = vmatpush1.msra.mxu0 %v1537
    %1549 = vmatprep.subr.mxu0 0.0
    %1550 = vmatpush1.msra.mxu0 %v1536
    %1551 = vmatprep.subr.mxu0 0.0
    %1552 = vmatpush1.msra.mxu0 %v1535
    %1553 = vmatprep.subr.mxu0 0.0
    %1554 = vmatpush1.msra.mxu0 %v1534
    %1555 = vmatprep.subr.mxu0 0.0
    %1556 = vmatpush1.msra.mxu0 %v1533
    %1557 = vmatprep.subr.mxu0 0.0
    %1558 = vmatpush1.msra.mxu0 %v1532
    %1559 = vmatprep.subr.mxu0 0.0
    %1560 = vmatpush1.msra.mxu0 %v1531
    %1561 = vmatprep.subr.mxu0 0.0
    %1562 = vmatpush1.msra.mxu0 %v1530
    %1563 = vmatprep.subr.mxu0 0.0
    %1564 = vmatpush1.msra.mxu0 %v1529
    %1565 = vmatprep.subr.mxu0 0.0
    %1566 = vmatpush1.msra.mxu0 %v1528
    %1567 = vmatprep.subr.mxu0 0.0
    %1568 = vmatpush1.msra.mxu0 %v1527
    %1569 = vmatprep.subr.mxu0 0.0
    %1570 = vmatpush1.msra.mxu0 %v1526
    %1571 = vmatprep.subr.mxu0 0.0
    %1572 = vmatpush1.msra.mxu0 %v1525
    %1573 = vmatprep.subr.mxu0 0.0
    %1574 = vmatpush2.msra.mxu0 0.0
    %1575 = vmatprep.subr.mxu0 0.0
    %1576 = vmatpush2.msra.mxu0 0.0
    %1577 = vmatprep.subr.mxu0 0.0
    %1578 = vmatpush2.msra.mxu0 0.0
    %1579 = vmatprep.subr.mxu0 0.0
    %1580 = vmatpush2.msra.mxu0 0.0
    %1581 = vmatprep.subr.mxu0 0.0
    %1582 = vmatpush2.msra.mxu0 0.0
    %1583 = vmatprep.subr.mxu0 0.0
    %1584 = vmatpush2.msra.mxu0 0.0
    %1585 = vmatprep.subr.mxu0 0.0
    %1586 = vmatpush2.msra.mxu0 0.0
    %1587 = vmatprep.subr.mxu0 0.0
    %1588 = vmatpush2.msra.mxu0 0.0
    %1589 = vmatprep.subr.mxu0 0.0
    %1590 = vmatpush2.msra.mxu0 0.0
    %1591 = vmatprep.subr.mxu0 0.0
    %1592 = vmatpush2.msra.mxu0 0.0
    %1593 = vmatprep.subr.mxu0 0.0
    %1594 = vmatpush2.msra.mxu0 0.0
    %1595 = vmatprep.subr.mxu0 0.0
    %1596 = vmatpush2.msra.mxu0 0.0
    %1597 = vmatprep.subr.mxu0 0.0
    %1598 = vmatpush2.msra.mxu0 0.0
    %1599 = vmatprep.subr.mxu0 0.0
    %1600 = vmatpush2.msra.mxu0 0.0
    %1601 = vmatprep.subr.mxu0 0.0
    %1602 = vmatpush2.msra.mxu0 0.0
    %1603 = vmatprep.subr.mxu0 0.0
    %1604 = vmatpush2.msra.mxu0 0.0
    %1605 = vmatprep.mubr.f32.mxu0 0.0
    %1606 = vmatmul.mubr.f32.gmra.mxu0 %v1524
    %v1607 = vpop.f32.mrf.mxu0
    %v1608 = vadd.f32 0.0, %v1607
    %v1609 = vpop.f32.mrf.mxu0
    %1610 = vdwg.mxu0
    %1611 = vst [vmem:[#allocation20] sm:$0xff] %v1608
    %v1612 = vld [vmem:[#allocation14] sm:$0xff]
    %v1613 = vld [vmem:[#allocation14 + $0x8] sm:$0xff]
    %v1614 = vld [vmem:[#allocation14 + $0x10] sm:$0xff]
    %v1615 = vld [vmem:[#allocation14 + $0x18] sm:$0xff]
    %v1616 = vld [vmem:[#allocation14 + $0x20] sm:$0xff]
    %v1617 = vld [vmem:[#allocation14 + $0x28] sm:$0xff]
    %v1618 = vld [vmem:[#allocation14 + $0x30] sm:$0xff]
    %v1619 = vld [vmem:[#allocation14 + $0x38] sm:$0xff]
    %v1620 = vld [vmem:[#allocation14 + $0x40] sm:$0xff]
    %v1621 = vld [vmem:[#allocation14 + $0x48] sm:$0xff]
    %v1622 = vld [vmem:[#allocation14 + $0x50] sm:$0xff]
    %v1623 = vld [vmem:[#allocation14 + $0x58] sm:$0xff]
    %v1624 = vld [vmem:[#allocation14 + $0x60] sm:$0xff]
    %v1625 = vld [vmem:[#allocation14 + $0x68] sm:$0xff]
    %v1626 = vld [vmem:[#allocation14 + $0x70] sm:$0xff]
    %v1627 = vld [vmem:[#allocation14 + $0x78] sm:$0xff]
    %v1628 = vld [vmem:[%s10] sm:$0x1]
    %v1630 = vlaneseq
    %v1631 = vshrl.u32 %v1630, 7
    %v1632 = vsub.s32 0, %v1631
    %v1633 = vrot.slane %v1628, %v1632
    %1635 = vmatprep.subr.mxu0 0.0
    %1636 = vmatpush1.msra.mxu0 %v1627
    %1637 = vmatprep.subr.mxu0 0.0
    %1638 = vmatpush1.msra.mxu0 %v1626
    %1639 = vmatprep.subr.mxu0 0.0
    %1640 = vmatpush1.msra.mxu0 %v1625
    %1641 = vmatprep.subr.mxu0 0.0
    %1642 = vmatpush1.msra.mxu0 %v1624
    %1643 = vmatprep.subr.mxu0 0.0
    %1644 = vmatpush1.msra.mxu0 %v1623
    %1645 = vmatprep.subr.mxu0 0.0
    %1646 = vmatpush1.msra.mxu0 %v1622
    %1647 = vmatprep.subr.mxu0 0.0
    %1648 = vmatpush1.msra.mxu0 %v1621
    %1649 = vmatprep.subr.mxu0 0.0
    %1650 = vmatpush1.msra.mxu0 %v1620
    %1651 = vmatprep.subr.mxu0 0.0
    %1652 = vmatpush1.msra.mxu0 %v1619
    %1653 = vmatprep.subr.mxu0 0.0
    %1654 = vmatpush1.msra.mxu0 %v1618
    %1655 = vmatprep.subr.mxu0 0.0
    %1656 = vmatpush1.msra.mxu0 %v1617
    %1657 = vmatprep.subr.mxu0 0.0
    %1658 = vmatpush1.msra.mxu0 %v1616
    %1659 = vmatprep.subr.mxu0 0.0
    %1660 = vmatpush1.msra.mxu0 %v1615
    %1661 = vmatprep.subr.mxu0 0.0
    %1662 = vmatpush1.msra.mxu0 %v1614
    %1663 = vmatprep.subr.mxu0 0.0
    %1664 = vmatpush1.msra.mxu0 %v1613
    %1665 = vmatprep.subr.mxu0 0.0
    %1666 = vmatpush1.msra.mxu0 %v1612
    %1667 = vmatprep.subr.mxu0 0.0
    %1668 = vmatpush2.msra.mxu0 0.0
    %1669 = vmatprep.subr.mxu0 0.0
    %1670 = vmatpush2.msra.mxu0 0.0
    %1671 = vmatprep.subr.mxu0 0.0
    %1672 = vmatpush2.msra.mxu0 0.0
    %1673 = vmatprep.subr.mxu0 0.0
    %1674 = vmatpush2.msra.mxu0 0.0
    %1675 = vmatprep.subr.mxu0 0.0
    %1676 = vmatpush2.msra.mxu0 0.0
    %1677 = vmatprep.subr.mxu0 0.0
    %1678 = vmatpush2.msra.mxu0 0.0
    %1679 = vmatprep.subr.mxu0 0.0
    %1680 = vmatpush2.msra.mxu0 0.0
    %1681 = vmatprep.subr.mxu0 0.0
    %1682 = vmatpush2.msra.mxu0 0.0
    %1683 = vmatprep.subr.mxu0 0.0
    %1684 = vmatpush2.msra.mxu0 0.0
    %1685 = vmatprep.subr.mxu0 0.0
    %1686 = vmatpush2.msra.mxu0 0.0
    %1687 = vmatprep.subr.mxu0 0.0
    %1688 = vmatpush2.msra.mxu0 0.0
    %1689 = vmatprep.subr.mxu0 0.0
    %1690 = vmatpush2.msra.mxu0 0.0
    %1691 = vmatprep.subr.mxu0 0.0
    %1692 = vmatpush2.msra.mxu0 0.0
    %1693 = vmatprep.subr.mxu0 0.0
    %1694 = vmatpush2.msra.mxu0 0.0
    %1695 = vmatprep.subr.mxu0 0.0
    %1696 = vmatpush2.msra.mxu0 0.0
    %1697 = vmatprep.subr.mxu0 0.0
    %1698 = vmatpush2.msra.mxu0 0.0
    %1699 = vmatprep.mubr.f32.mxu0 0.0
    %1700 = vmatmul.mubr.f32.gmra.mxu0 %v1428
    %v1701 = vpop.f32.mrf.mxu0
    %v1702 = vadd.f32 %v1633, %v1701
    %v1703 = vpop.f32.mrf.mxu0
    %1704 = vdwg.mxu0
    %v1705 = vmax.f32 %v1702, 0.0
    %v1706 = vld [vmem:[#allocation16] sm:$0xff]
    %v1707 = vld [vmem:[#allocation16 + $0x8] sm:$0xff]
    %v1708 = vld [vmem:[#allocation16 + $0x10] sm:$0xff]
    %v1709 = vld [vmem:[#allocation16 + $0x18] sm:$0xff]
    %v1710 = vld [vmem:[#allocation16 + $0x20] sm:$0xff]
    %v1711 = vld [vmem:[#allocation16 + $0x28] sm:$0xff]
    %v1712 = vld [vmem:[#allocation16 + $0x30] sm:$0xff]
    %v1713 = vld [vmem:[#allocation16 + $0x38] sm:$0xff]
    %v1714 = vld [vmem:[#allocation16 + $0x40] sm:$0xff]
    %v1715 = vld [vmem:[#allocation16 + $0x48] sm:$0xff]
    %v1716 = vld [vmem:[#allocation16 + $0x50] sm:$0xff]
    %v1717 = vld [vmem:[#allocation16 + $0x58] sm:$0xff]
    %v1718 = vld [vmem:[#allocation16 + $0x60] sm:$0xff]
    %v1719 = vld [vmem:[#allocation16 + $0x68] sm:$0xff]
    %v1720 = vld [vmem:[#allocation16 + $0x70] sm:$0xff]
    %v1721 = vld [vmem:[#allocation16 + $0x78] sm:$0xff]
    %1722 = vmatprep.subr.mxu0 0.0
    %1723 = vmatpush1.msra.mxu0 %v1721
    %1724 = vmatprep.subr.mxu0 0.0
    %1725 = vmatpush1.msra.mxu0 %v1720
    %1726 = vmatprep.subr.mxu0 0.0
    %1727 = vmatpush1.msra.mxu0 %v1719
    %1728 = vmatprep.subr.mxu0 0.0
    %1729 = vmatpush1.msra.mxu0 %v1718
    %1730 = vmatprep.subr.mxu0 0.0
    %1731 = vmatpush1.msra.mxu0 %v1717
    %1732 = vmatprep.subr.mxu0 0.0
    %1733 = vmatpush1.msra.mxu0 %v1716
    %1734 = vmatprep.subr.mxu0 0.0
    %1735 = vmatpush1.msra.mxu0 %v1715
    %1736 = vmatprep.subr.mxu0 0.0
    %1737 = vmatpush1.msra.mxu0 %v1714
    %1738 = vmatprep.subr.mxu0 0.0
    %1739 = vmatpush1.msra.mxu0 %v1713
    %1740 = vmatprep.subr.mxu0 0.0
    %1741 = vmatpush1.msra.mxu0 %v1712
    %1742 = vmatprep.subr.mxu0 0.0
    %1743 = vmatpush1.msra.mxu0 %v1711
    %1744 = vmatprep.subr.mxu0 0.0
    %1745 = vmatpush1.msra.mxu0 %v1710
    %1746 = vmatprep.subr.mxu0 0.0
    %1747 = vmatpush1.msra.mxu0 %v1709
    %1748 = vmatprep.subr.mxu0 0.0
    %1749 = vmatpush1.msra.mxu0 %v1708
    %1750 = vmatprep.subr.mxu0 0.0
    %1751 = vmatpush1.msra.mxu0 %v1707
    %1752 = vmatprep.subr.mxu0 0.0
    %1753 = vmatpush1.msra.mxu0 %v1706
    %1754 = vmatprep.subr.mxu0 0.0
    %1755 = vmatpush2.msra.mxu0 0.0
    %1756 = vmatprep.subr.mxu0 0.0
    %1757 = vmatpush2.msra.mxu0 0.0
    %1758 = vmatprep.subr.mxu0 0.0
    %1759 = vmatpush2.msra.mxu0 0.0
    %1760 = vmatprep.subr.mxu0 0.0
    %1761 = vmatpush2.msra.mxu0 0.0
    %1762 = vmatprep.subr.mxu0 0.0
    %1763 = vmatpush2.msra.mxu0 0.0
    %1764 = vmatprep.subr.mxu0 0.0
    %1765 = vmatpush2.msra.mxu0 0.0
    %1766 = vmatprep.subr.mxu0 0.0
    %1767 = vmatpush2.msra.mxu0 0.0
    %1768 = vmatprep.subr.mxu0 0.0
    %1769 = vmatpush2.msra.mxu0 0.0
    %1770 = vmatprep.subr.mxu0 0.0
    %1771 = vmatpush2.msra.mxu0 0.0
    %1772 = vmatprep.subr.mxu0 0.0
    %1773 = vmatpush2.msra.mxu0 0.0
    %1774 = vmatprep.subr.mxu0 0.0
    %1775 = vmatpush2.msra.mxu0 0.0
    %1776 = vmatprep.subr.mxu0 0.0
    %1777 = vmatpush2.msra.mxu0 0.0
    %1778 = vmatprep.subr.mxu0 0.0
    %1779 = vmatpush2.msra.mxu0 0.0
    %1780 = vmatprep.subr.mxu0 0.0
    %1781 = vmatpush2.msra.mxu0 0.0
    %1782 = vmatprep.subr.mxu0 0.0
    %1783 = vmatpush2.msra.mxu0 0.0
    %1784 = vmatprep.subr.mxu0 0.0
    %1785 = vmatpush2.msra.mxu0 0.0
    %1786 = vmatprep.mubr.f32.mxu0 0.0
    %1787 = vmatmul.mubr.f32.gmra.mxu0 %v1705
    %v1788 = vpop.f32.mrf.mxu0
    %v1789 = vadd.f32 0.0, %v1788
    %v1790 = vpop.f32.mrf.mxu0
    %1791 = vdwg.mxu0
    %v1792 = vld [vmem:[#allocation17] sm:$0xff]
    %v1793 = vld [vmem:[#allocation17 + $0x8] sm:$0xff]
    %v1794 = vld [vmem:[#allocation17 + $0x10] sm:$0xff]
    %v1795 = vld [vmem:[#allocation17 + $0x18] sm:$0xff]
    %v1796 = vld [vmem:[#allocation17 + $0x20] sm:$0xff]
    %v1797 = vld [vmem:[#allocation17 + $0x28] sm:$0xff]
    %v1798 = vld [vmem:[#allocation17 + $0x30] sm:$0xff]
    %v1799 = vld [vmem:[#allocation17 + $0x38] sm:$0xff]
    %v1800 = vld [vmem:[#allocation17 + $0x40] sm:$0xff]
    %v1801 = vld [vmem:[#allocation17 + $0x48] sm:$0xff]
    %v1802 = vld [vmem:[#allocation17 + $0x50] sm:$0xff]
    %v1803 = vld [vmem:[#allocation17 + $0x58] sm:$0xff]
    %v1804 = vld [vmem:[#allocation17 + $0x60] sm:$0xff]
    %v1805 = vld [vmem:[#allocation17 + $0x68] sm:$0xff]
    %v1806 = vld [vmem:[#allocation17 + $0x70] sm:$0xff]
    %v1807 = vld [vmem:[#allocation17 + $0x78] sm:$0xff]
    %v1808 = vld [vmem:[%s13] sm:$0x1]
    %v1810 = vlaneseq
    %v1811 = vshrl.u32 %v1810, 7
    %v1812 = vsub.s32 0, %v1811
    %v1813 = vrot.slane %v1808, %v1812
    %1815 = vmatprep.subr.mxu0 0.0
    %1816 = vmatpush1.msra.mxu0 %v1807
    %1817 = vmatprep.subr.mxu0 0.0
    %1818 = vmatpush1.msra.mxu0 %v1806
    %1819 = vmatprep.subr.mxu0 0.0
    %1820 = vmatpush1.msra.mxu0 %v1805
    %1821 = vmatprep.subr.mxu0 0.0
    %1822 = vmatpush1.msra.mxu0 %v1804
    %1823 = vmatprep.subr.mxu0 0.0
    %1824 = vmatpush1.msra.mxu0 %v1803
    %1825 = vmatprep.subr.mxu0 0.0
    %1826 = vmatpush1.msra.mxu0 %v1802
    %1827 = vmatprep.subr.mxu0 0.0
    %1828 = vmatpush1.msra.mxu0 %v1801
    %1829 = vmatprep.subr.mxu0 0.0
    %1830 = vmatpush1.msra.mxu0 %v1800
    %1831 = vmatprep.subr.mxu0 0.0
    %1832 = vmatpush1.msra.mxu0 %v1799
    %1833 = vmatprep.subr.mxu0 0.0
    %1834 = vmatpush1.msra.mxu0 %v1798
    %1835 = vmatprep.subr.mxu0 0.0
    %1836 = vmatpush1.msra.mxu0 %v1797
    %1837 = vmatprep.subr.mxu0 0.0
    %1838 = vmatpush1.msra.mxu0 %v1796
    %1839 = vmatprep.subr.mxu0 0.0
    %1840 = vmatpush1.msra.mxu0 %v1795
    %1841 = vmatprep.subr.mxu0 0.0
    %1842 = vmatpush1.msra.mxu0 %v1794
    %1843 = vmatprep.subr.mxu0 0.0
    %1844 = vmatpush1.msra.mxu0 %v1793
    %1845 = vmatprep.subr.mxu0 0.0
    %1846 = vmatpush1.msra.mxu0 %v1792
    %1847 = vmatprep.subr.mxu0 0.0
    %1848 = vmatpush2.msra.mxu0 0.0
    %1849 = vmatprep.subr.mxu0 0.0
    %1850 = vmatpush2.msra.mxu0 0.0
    %1851 = vmatprep.subr.mxu0 0.0
    %1852 = vmatpush2.msra.mxu0 0.0
    %1853 = vmatprep.subr.mxu0 0.0
    %1854 = vmatpush2.msra.mxu0 0.0
    %1855 = vmatprep.subr.mxu0 0.0
    %1856 = vmatpush2.msra.mxu0 0.0
    %1857 = vmatprep.subr.mxu0 0.0
    %1858 = vmatpush2.msra.mxu0 0.0
    %1859 = vmatprep.subr.mxu0 0.0
    %1860 = vmatpush2.msra.mxu0 0.0
    %1861 = vmatprep.subr.mxu0 0.0
    %1862 = vmatpush2.msra.mxu0 0.0
    %1863 = vmatprep.subr.mxu0 0.0
    %1864 = vmatpush2.msra.mxu0 0.0
    %1865 = vmatprep.subr.mxu0 0.0
    %1866 = vmatpush2.msra.mxu0 0.0
    %1867 = vmatprep.subr.mxu0 0.0
    %1868 = vmatpush2.msra.mxu0 0.0
    %1869 = vmatprep.subr.mxu0 0.0
    %1870 = vmatpush2.msra.mxu0 0.0
    %1871 = vmatprep.subr.mxu0 0.0
    %1872 = vmatpush2.msra.mxu0 0.0
    %1873 = vmatprep.subr.mxu0 0.0
    %1874 = vmatpush2.msra.mxu0 0.0
    %1875 = vmatprep.subr.mxu0 0.0
    %1876 = vmatpush2.msra.mxu0 0.0
    %1877 = vmatprep.subr.mxu0 0.0
    %1878 = vmatpush2.msra.mxu0 0.0
    %1879 = vmatprep.mubr.f32.mxu0 0.0
    %1880 = vmatmul.mubr.f32.gmra.mxu0 %v1428
    %v1881 = vpop.f32.mrf.mxu0
    %v1882 = vadd.f32 %v1813, %v1881
    %v1883 = vpop.f32.mrf.mxu0
    %1884 = vdwg.mxu0
    %v1885 = vmax.f32 %v1882, 0.0
    %v1886 = vld [vmem:[#allocation19] sm:$0xff]
    %v1887 = vld [vmem:[#allocation19 + $0x8] sm:$0xff]
    %v1888 = vld [vmem:[#allocation19 + $0x10] sm:$0xff]
    %v1889 = vld [vmem:[#allocation19 + $0x18] sm:$0xff]
    %v1890 = vld [vmem:[#allocation19 + $0x20] sm:$0xff]
    %v1891 = vld [vmem:[#allocation19 + $0x28] sm:$0xff]
    %v1892 = vld [vmem:[#allocation19 + $0x30] sm:$0xff]
    %v1893 = vld [vmem:[#allocation19 + $0x38] sm:$0xff]
    %v1894 = vld [vmem:[#allocation19 + $0x40] sm:$0xff]
    %v1895 = vld [vmem:[#allocation19 + $0x48] sm:$0xff]
    %v1896 = vld [vmem:[#allocation19 + $0x50] sm:$0xff]
    %v1897 = vld [vmem:[#allocation19 + $0x58] sm:$0xff]
    %v1898 = vld [vmem:[#allocation19 + $0x60] sm:$0xff]
    %v1899 = vld [vmem:[#allocation19 + $0x68] sm:$0xff]
    %v1900 = vld [vmem:[#allocation19 + $0x70] sm:$0xff]
    %v1901 = vld [vmem:[#allocation19 + $0x78] sm:$0xff]
    %1902 = vmatprep.subr.mxu0 0.0
    %1903 = vmatpush1.msra.mxu0 %v1901
    %1904 = vmatprep.subr.mxu0 0.0
    %1905 = vmatpush1.msra.mxu0 %v1900
    %1906 = vmatprep.subr.mxu0 0.0
    %1907 = vmatpush1.msra.mxu0 %v1899
    %1908 = vmatprep.subr.mxu0 0.0
    %1909 = vmatpush1.msra.mxu0 %v1898
    %1910 = vmatprep.subr.mxu0 0.0
    %1911 = vmatpush1.msra.mxu0 %v1897
    %1912 = vmatprep.subr.mxu0 0.0
    %1913 = vmatpush1.msra.mxu0 %v1896
    %1914 = vmatprep.subr.mxu0 0.0
    %1915 = vmatpush1.msra.mxu0 %v1895
    %1916 = vmatprep.subr.mxu0 0.0
    %1917 = vmatpush1.msra.mxu0 %v1894
    %1918 = vmatprep.subr.mxu0 0.0
    %1919 = vmatpush1.msra.mxu0 %v1893
    %1920 = vmatprep.subr.mxu0 0.0
    %1921 = vmatpush1.msra.mxu0 %v1892
    %1922 = vmatprep.subr.mxu0 0.0
    %1923 = vmatpush1.msra.mxu0 %v1891
    %1924 = vmatprep.subr.mxu0 0.0
    %1925 = vmatpush1.msra.mxu0 %v1890
    %1926 = vmatprep.subr.mxu0 0.0
    %1927 = vmatpush1.msra.mxu0 %v1889
    %1928 = vmatprep.subr.mxu0 0.0
    %1929 = vmatpush1.msra.mxu0 %v1888
    %1930 = vmatprep.subr.mxu0 0.0
    %1931 = vmatpush1.msra.mxu0 %v1887
    %1932 = vmatprep.subr.mxu0 0.0
    %1933 = vmatpush1.msra.mxu0 %v1886
    %1934 = vmatprep.subr.mxu0 0.0
    %1935 = vmatpush2.msra.mxu0 0.0
    %1936 = vmatprep.subr.mxu0 0.0
    %1937 = vmatpush2.msra.mxu0 0.0
    %1938 = vmatprep.subr.mxu0 0.0
    %1939 = vmatpush2.msra.mxu0 0.0
    %1940 = vmatprep.subr.mxu0 0.0
    %1941 = vmatpush2.msra.mxu0 0.0
    %1942 = vmatprep.subr.mxu0 0.0
    %1943 = vmatpush2.msra.mxu0 0.0
    %1944 = vmatprep.subr.mxu0 0.0
    %1945 = vmatpush2.msra.mxu0 0.0
    %1946 = vmatprep.subr.mxu0 0.0
    %1947 = vmatpush2.msra.mxu0 0.0
    %1948 = vmatprep.subr.mxu0 0.0
    %1949 = vmatpush2.msra.mxu0 0.0
    %1950 = vmatprep.subr.mxu0 0.0
    %1951 = vmatpush2.msra.mxu0 0.0
    %1952 = vmatprep.subr.mxu0 0.0
    %1953 = vmatpush2.msra.mxu0 0.0
    %1954 = vmatprep.subr.mxu0 0.0
    %1955 = vmatpush2.msra.mxu0 0.0
    %1956 = vmatprep.subr.mxu0 0.0
    %1957 = vmatpush2.msra.mxu0 0.0
    %1958 = vmatprep.subr.mxu0 0.0
    %1959 = vmatpush2.msra.mxu0 0.0
    %1960 = vmatprep.subr.mxu0 0.0
    %1961 = vmatpush2.msra.mxu0 0.0
    %1962 = vmatprep.subr.mxu0 0.0
    %1963 = vmatpush2.msra.mxu0 0.0
    %1964 = vmatprep.subr.mxu0 0.0
    %1965 = vmatpush2.msra.mxu0 0.0
    %1966 = vmatprep.mubr.f32.mxu0 0.0
    %1967 = vmatmul.mubr.f32.gmra.mxu0 %v1885
    %v1968 = vpop.f32.mrf.mxu0
    %v1969 = vadd.f32 0.0, %v1968
    %v1970 = vpop.f32.mrf.mxu0
    %1971 = vdwg.mxu0
    %v1972 = vsub.f32 %v1789, %v1969
    %v1973 = vmul.f32 %v1972, %v1972
    %1974 = vadd.xlane.f32.xlu0 %v1973
    %v1975 = vpop.xlane.xlu0 %1974
    %v1976 = vmul.f32 %v1975, 0.0078125
    %vm1977 = vcmask 7168
    %1978 = vst.msk [vmem:[%s16] sm:$0xff] %vm1977, %v1976
    // Predicated region
    $region106: #{tpu_custom_call.1} parent=1 // pred_check
      _
    $region107: #{tpu_custom_call.1} parent=1 // pred_check_branch
      %1980 = sbr.rel (0) target = $region109
    $region108: #{tpu_custom_call.1} parent=1 // pred_region
      %s1982 = ssub.s32 128, 128
      %1983 = vsyncadd [#allocation4], %s1982
      %s1985 = sshll.u32 [#allocation20], 4
      %s1986 = int_to_ptr.vmem [resolvable:$true] %s1985
      %1988 = dma.vmem_to_hbm [thread:$0]  %s1986, 128, %s15, [#allocation4]
    $region109: #{tpu_custom_call.1} parent=1 // pred_fallthru
      _
    // Predicated region
    $region110: #{tpu_custom_call.1} parent=1 // pred_check
      _
    $region111: #{tpu_custom_call.1} parent=1 // pred_check_branch
      %1990 = sbr.rel (0) target = $region113
    $region112: #{tpu_custom_call.1} parent=1 // pred_region
      _
    $region113: #{tpu_custom_call.1} parent=1 // pred_fallthru
      _
    // Predicated region
    $region114: #{tpu_custom_call.1} parent=1 // pred_check
      _
    $region115: #{tpu_custom_call.1} parent=1 // pred_check_branch
      %1992 = sbr.rel (0) target = $region117
    $region116: #{tpu_custom_call.1} parent=1 // pred_region
      %1993 = dma.done [#allocation4], 128
    $region117: #{tpu_custom_call.1} parent=1 // pred_fallthru
      _
    // Predicated region
    $region118: #{tpu_custom_call.1} parent=1 // pred_check
      _
    $region119: #{tpu_custom_call.1} parent=1 // pred_check_branch
      %1995 = sbr.rel (0) target = $region121
    $region120: #{tpu_custom_call.1} parent=1 // pred_region
      _
    $region121: #{tpu_custom_call.1} parent=1 // pred_fallthru
      _
    %1996 = vsyncpa [#allocation3], 1
    %1997 = vsyncpa [#allocation6], 1
    %1998 = vsyncpa [#allocation9], 1
    %1999 = vsyncpa [#allocation12], 1
    %2000 = vsyncpa [#allocation15], 1
    %2001 = vsyncpa [#allocation18], 1
    %2002 = vsyncpa [#allocation4], 1

</llo_original>
